<compile_context>
chip_gen: v7x
topology: tpu7x:2x2x1
jax: 0.10.0
libtpu: 0.0.40
codegen_flags: <defaults>
</compile_context>

<pallas_src>
import functools
import math

import jax
import jax.numpy as jnp
from jax.experimental import pallas as pl
from jax.experimental.pallas import tpu as pltpu


def _round_up(x, m):
    return (x + m - 1) // m * m


# ---------------------------------------------------------------------------
# Fused kernel: input projections + all GCN2 layers (both branches) + heads.
# Single grid step; layers unrolled in straight-line code.
# ---------------------------------------------------------------------------
def _fused_net_kernel(xin_ref,       # [N, Fp]      bf16  ([x | str | 1 | 0] cols)
                      a_ref,         # [N, N]       bf16  ((1-alpha) folded)
                      w_in_ref,      # [Fp, 2H]     bf16  (block-diag lins0/lin11 + bias row)
                      w_layers_ref,  # [L, 4H, 2H]  bf16  (resident, (1-beta)I folded)
                      w_head_ref,    # [2H, 2H]     bf16  (lins1/lin3 heads)
                      b_head_ref,    # [1, 2H]      f32
                      out_ref,       # [N, 2H]      f32
                      *, alpha, num_layers, h2):
    # ---- fused input projections for both branches (bias folded in w_in) ---
    x0_f32 = jnp.maximum(
        jnp.dot(xin_ref[...], w_in_ref[...], preferred_element_type=jnp.float32),
        0.0)
    x = x0_f32.astype(jnp.bfloat16)                 # current [x | x1]
    x0a = (alpha * x0_f32).astype(jnp.bfloat16)     # alpha * [x_0 | x_1], constant

    # ---- unrolled GCN2 layers (both branches at once) -----------------------
    for layer in range(num_layers):
        # message passing: (1-alpha) * A_norm @ [x | x1]
        h = jnp.dot(a_ref[...], x,
                    preferred_element_type=jnp.float32).astype(jnp.bfloat16)
        # split K=2H matmuls: h @ ((1-b)I + b*blkdiag(W1)) + x0' @ ((1-b)I + b*blkdiag(W2))
        y = (jnp.dot(h, w_layers_ref[layer, 0:h2, :],
                     preferred_element_type=jnp.float32)
             + jnp.dot(x0a, w_layers_ref[layer, h2:, :],
                       preferred_element_type=jnp.float32))
        x = jnp.maximum(y, 0.0).astype(jnp.bfloat16)

    # ---- both (hidden -> 1) heads in one lane-dense matmul ------------------
    heads = jnp.dot(x, w_head_ref[...], preferred_element_type=jnp.float32)
    out_ref[...] = heads + b_head_ref[...]


def net_forward(packed, *, alpha, num_layers):
    xin = packed["xin"]
    n, f_pad = xin.shape
    h2 = packed["w_in"].shape[1]        # 2 * hidden  (both branches)
    h4 = packed["w_layers"].shape[1]    # 4 * hidden

    grid_spec = pltpu.PrefetchScalarGridSpec(
        num_scalar_prefetch=0,
        grid=(1,),
        in_specs=[
            pl.BlockSpec((n, f_pad), lambda l: (0, 0)),            # xin
            pl.BlockSpec((n, n), lambda l: (0, 0)),                # A_norm
            pl.BlockSpec((f_pad, h2), lambda l: (0, 0)),           # w_in
            pl.BlockSpec((num_layers, h4, h2), lambda l: (0, 0, 0)),  # w_layers (resident)
            pl.BlockSpec((h2, h2), lambda l: (0, 0)),              # w_head
            pl.BlockSpec((1, h2), lambda l: (0, 0)),               # b_head
        ],
        out_specs=pl.BlockSpec((n, h2), lambda l: (0, 0)),
    )

    slab = pl.pallas_call(
        functools.partial(_fused_net_kernel, alpha=alpha,
                          num_layers=num_layers, h2=h2),
        out_shape=jax.ShapeDtypeStruct((n, h2), jnp.float32),
        grid_spec=grid_spec,
        compiler_params=pltpu.CompilerParams(
            dimension_semantics=("arbitrary",)),
    )(xin, packed["a_norm"], packed["w_in"], packed["w_layers"],
      packed["w_head"], packed["b_head"])

    return slab[:, 0:1], slab[:, 1:2]              # z, z1


# ---------------------------------------------------------------------------
# One-time host-side packing (weight folding, done in f32, cast once to bf16)
# ---------------------------------------------------------------------------
def pack_for_kernel(params, data_x, data_str, a_norm, *, alpha, theta,
                    hidden, num_layers):
    n, f_in = data_x.shape
    f_str = data_str.shape[1]
    f_cat = f_in + f_str
    f_pad = _round_up(f_cat + 1, 128)          # +1 column of ones (bias fold)
    h, h2 = hidden, 2 * hidden

    # inputs: [data.x | data_str | 1.0 | zero-pad] -> lane-padded to 128 mult.
    xin = jnp.zeros((n, f_pad), jnp.float32)
    xin = xin.at[:, :f_in].set(data_x)
    xin = xin.at[:, f_in:f_cat].set(data_str)
    xin = xin.at[:, f_cat].set(1.0)

    # block-diagonal input projection: lins[0] (branch 0) + lin11 (branch 1),
    # biases folded as the row multiplying the constant-1 input column.
    w_in = jnp.zeros((f_pad, h2), jnp.float32)
    w_in = w_in.at[:f_in, :h].set(params["lins0_w"])
    w_in = w_in.at[f_in:f_cat, h:].set(params["lin11_w"])
    w_in = w_in.at[f_cat, :h].set(params["lins0_b"][0])
    w_in = w_in.at[f_cat, h:].set(params["lin11_b"][0])

    # per-layer GCN2 weights with (1-beta)*I and beta*W{1,2} folded in:
    #   [h | x0'] @ ((1-beta)*[[I],[I]] + beta*[[blkdiag(W1,W1')],[blkdiag(W2,W2')]])
    eye2 = jnp.concatenate([jnp.eye(h2, dtype=jnp.float32)] * 2, axis=0)  # [4H,2H]
    w_layers = []
    for layer in range(num_layers):
        beta = math.log(theta / (layer + 1) + 1.0)
        w_big = jnp.zeros((2 * h2, h2), jnp.float32)
        w_big = w_big.at[0:h, 0:h].set(params["convs_w1"][layer])
        w_big = w_big.at[h:h2, h:h2].set(params["convs1_w1"][layer])
        w_big = w_big.at[h2:h2 + h, 0:h].set(params["convs_w2"][layer])
        w_big = w_big.at[h2 + h:2 * h2, h:h2].set(params["convs1_w2"][layer])
        w_layers.append((1.0 - beta) * eye2 + beta * w_big)
    w_layers = jnp.stack(w_layers, axis=0)                     # [L, 4H, 2H]

    # output heads lins[1] / lin3 packed into one lane-dense [2H, 2H] matrix
    w_head = jnp.zeros((h2, h2), jnp.float32)
    w_head = w_head.at[0:h, 0:1].set(params["lins1_w"])
    w_head = w_head.at[h:h2, 1:2].set(params["lin3_w"])
    b_head = jnp.zeros((1, h2), jnp.float32)
    b_head = b_head.at[0, 0].set(params["lins1_b"][0, 0])
    b_head = b_head.at[0, 1].set(params["lin3_b"][0, 0])

    bf = jnp.bfloat16
    return dict(
        xin=xin.astype(bf),
        a_norm=((1.0 - alpha) * a_norm).astype(bf),   # fold (1-alpha) into A
        w_in=w_in.astype(bf),
        w_layers=w_layers.astype(bf),
        w_head=w_head.astype(bf),
        b_head=b_head,
    )


# ---------------------------------------------------------------------------
# Pure-JAX reference (same bf16 matmul inputs, f32 accumulation)
# ---------------------------------------------------------------------------
def net_forward_reference(params, data_x, data_str, a_norm, *,
                          alpha, theta, num_layers):
    bf = jnp.bfloat16

    def dot(a, b):
        return jnp.dot(a.astype(bf), b.astype(bf),
                       preferred_element_type=jnp.float32)

    x = x_0 = jnp.maximum(dot(data_x, params["lins0_w"]) + params["lins0_b"], 0.0)
    x1 = x_1 = jnp.maximum(dot(data_str, params["lin11_w"]) + params["lin11_b"], 0.0)
    for layer in range(num_layers):
        beta = math.log(theta / (layer + 1) + 1.0)
        h = (1.0 - alpha) * dot(a_norm, x)
        xp = alpha * x_0
        x = jnp.maximum((1.0 - beta) * (h + xp)
                        + beta * (dot(h, params["convs_w1"][layer])
                                  + dot(xp, params["convs_w2"][layer])), 0.0)
        h1 = (1.0 - alpha) * dot(a_norm, x1)
        x1p = alpha * x_1
        x1 = jnp.maximum((1.0 - beta) * (h1 + x1p)
                         + beta * (dot(h1, params["convs1_w1"][layer])
                                   + dot(x1p, params["convs1_w2"][layer])), 0.0)
    z = dot(x, params["lins1_w"]) + params["lins1_b"]
    z1 = dot(x1, params["lin3_w"]) + params["lin3_b"]
    return z, z1


# ---------------------------------------------------------------------------
# Deterministic setup (synthetic parameters / graph)
# ---------------------------------------------------------------------------
def build_normalized_adjacency(key, n):
    a = (jax.random.uniform(key, (n, n)) < 0.1).astype(jnp.float32)
    a = jnp.maximum(a, a.T)                          # symmetric
    a = a * (1.0 - jnp.eye(n, dtype=jnp.float32))    # add_self_loops=False
    deg = a.sum(axis=1)
    dinv = jnp.where(deg > 0, 1.0 / jnp.sqrt(jnp.maximum(deg, 1e-12)), 0.0)
    return a * dinv[:, None] * dinv[None, :]         # D^{-1/2} A D^{-1/2}


def make_params(key, f_in, f_str, hidden, num_layers):
    keys = iter(jax.random.split(key, 8 + 4 * num_layers))

    def w(shape, scale=0.1):
        return scale * jax.random.normal(next(keys), shape, jnp.float32)

    return {
        "lins0_w": w((f_in, hidden)),   "lins0_b": w((1, hidden)),
        "lins1_w": w((hidden, 1)),      "lins1_b": w((1, 1)),
        "lin11_w": w((f_str, hidden)),  "lin11_b": w((1, hidden)),
        "lin3_w":  w((hidden, 1)),      "lin3_b":  w((1, 1)),
        "convs_w1":  [w((hidden, hidden)) for _ in range(num_layers)],
        "convs_w2":  [w((hidden, hidden)) for _ in range(num_layers)],
        "convs1_w1": [w((hidden, hidden)) for _ in range(num_layers)],
        "convs1_w2": [w((hidden, hidden)) for _ in range(num_layers)],
    }


if __name__ == "__main__":
    N, F_IN, F_STR, HIDDEN, NUM_LAYERS = 128, 100, 58, 64, 4
    ALPHA, THETA = 0.4, 0.9

    key = jax.random.PRNGKey(0)
    k_param, k_x, k_str, k_adj = jax.random.split(key, 4)

    params = make_params(k_param, F_IN, F_STR, HIDDEN, NUM_LAYERS)
    data_x = jax.random.normal(k_x, (N, F_IN), jnp.float32)        # data.x
    data_str = jax.random.normal(k_str, (N, F_STR), jnp.float32)   # data_str
    a_norm = build_normalized_adjacency(k_adj, N)                  # dense gcn_norm

    packed = pack_for_kernel(params, data_x, data_str, a_norm,
                             alpha=ALPHA, theta=THETA,
                             hidden=HIDDEN, num_layers=NUM_LAYERS)
    z, z1 = net_forward(packed, alpha=ALPHA, num_layers=NUM_LAYERS)
    jax.block_until_ready((z, z1))

    assert z.shape == (N, 1) and z1.shape == (N, 1)
    assert bool(jnp.all(jnp.isfinite(z))) and bool(jnp.all(jnp.isfinite(z1)))

    z_ref, z1_ref = net_forward_reference(params, data_x, data_str, a_norm,
                                          alpha=ALPHA, theta=THETA,
                                          num_layers=NUM_LAYERS)
    err = max(float(jnp.max(jnp.abs(z - z_ref))),
              float(jnp.max(jnp.abs(z1 - z1_ref))))
    assert err < 0.1, f"kernel vs reference mismatch: {err}"
    print("KERNEL_OK")
</pallas_src>

<mosaic_0001>
module attributes {stable_mosaic.version = 11 : i64} {
  func.func @_fused_net_kernel(%arg0: i32, %arg1: memref<128x256xbf16, #tpu.memory_space<vmem>>, %arg2: memref<128x128xbf16, #tpu.memory_space<vmem>>, %arg3: memref<256x128xbf16, #tpu.memory_space<vmem>>, %arg4: memref<4x256x128xbf16, #tpu.memory_space<vmem>>, %arg5: memref<128x128xbf16, #tpu.memory_space<vmem>>, %arg6: memref<1x128xf32, #tpu.memory_space<vmem>>, %arg7: memref<128x128xf32, #tpu.memory_space<vmem>>) attributes {dimension_semantics = [#tpu.dimension_semantics<arbitrary>], iteration_bounds = array<i64: 1>, scalar_prefetch = 0 : i64, scratch_operands = 0 : i64, tpu.core_type = #tpu.core_type<tc>, window_params = [{pipeline_mode = #tpu.pipeline_mode<synchronous>, transform_indices = @transform_0, window_bounds = array<i64: 128, 256>}, {pipeline_mode = #tpu.pipeline_mode<synchronous>, transform_indices = @transform_1, window_bounds = array<i64: 128, 128>}, {pipeline_mode = #tpu.pipeline_mode<synchronous>, transform_indices = @transform_2, window_bounds = array<i64: 256, 128>}, {pipeline_mode = #tpu.pipeline_mode<synchronous>, transform_indices = @transform_3, window_bounds = array<i64: 4, 256, 128>}, {pipeline_mode = #tpu.pipeline_mode<synchronous>, transform_indices = @transform_4, window_bounds = array<i64: 128, 128>}, {pipeline_mode = #tpu.pipeline_mode<synchronous>, transform_indices = @transform_5, window_bounds = array<i64: 1, 128>}, {pipeline_mode = #tpu.pipeline_mode<synchronous>, transform_indices = @transform_6, window_bounds = array<i64: 128, 128>}]} {
    %c0 = arith.constant 0 : index
    %c0_0 = arith.constant 0 : index
    %0 = vector.load %arg1[%c0, %c0_0] : memref<128x256xbf16, #tpu.memory_space<vmem>>, vector<128x256xbf16>
    %c0_1 = arith.constant 0 : index
    %c0_2 = arith.constant 0 : index
    %1 = vector.load %arg3[%c0_1, %c0_2] : memref<256x128xbf16, #tpu.memory_space<vmem>>, vector<256x128xbf16>
    %cst = arith.constant dense<0.000000e+00> : vector<128x128xf32>
    %2 = tpu.matmul %0, %1, %cst {dimension_numbers = #tpu.dot_dimension_numbers<[1], [0], [0], [1], [0, 0, 1, 1], [], []>} : vector<128x256xbf16>, vector<256x128xbf16>, vector<128x128xf32> -> vector<128x128xf32>
    %cst_3 = arith.constant 0.000000e+00 : f32
    %3 = vector.broadcast %cst_3 : f32 to vector<128x128xf32>
    %4 = arith.maximumf %2, %3 : vector<128x128xf32>
    %5 = arith.truncf %4 : vector<128x128xf32> to vector<128x128xbf16>
    %cst_4 = arith.constant 4.000000e-01 : f32
    %6 = vector.broadcast %cst_4 : f32 to vector<128x128xf32>
    %7 = arith.mulf %6, %4 : vector<128x128xf32>
    %8 = arith.truncf %7 : vector<128x128xf32> to vector<128x128xbf16>
    %c0_5 = arith.constant 0 : index
    %c0_6 = arith.constant 0 : index
    %9 = vector.load %arg2[%c0_5, %c0_6] : memref<128x128xbf16, #tpu.memory_space<vmem>>, vector<128x128xbf16>
    %cst_7 = arith.constant dense<0.000000e+00> : vector<128x128xf32>
    %10 = tpu.matmul %9, %5, %cst_7 {dimension_numbers = #tpu.dot_dimension_numbers<[1], [0], [0], [1], [0, 0, 1, 1], [], []>} : vector<128x128xbf16>, vector<128x128xbf16>, vector<128x128xf32> -> vector<128x128xf32>
    %11 = arith.truncf %10 : vector<128x128xf32> to vector<128x128xbf16>
    %c0_8 = arith.constant 0 : index
    %c0_9 = arith.constant 0 : index
    %c0_10 = arith.constant 0 : index
    %12 = vector.load %arg4[%c0_8, %c0_9, %c0_10] : memref<4x256x128xbf16, #tpu.memory_space<vmem>>, vector<1x128x128xbf16>
    %13 = vector.shape_cast %12 : vector<1x128x128xbf16> to vector<128x128xbf16>
    %cst_11 = arith.constant dense<0.000000e+00> : vector<128x128xf32>
    %14 = tpu.matmul %11, %13, %cst_11 {dimension_numbers = #tpu.dot_dimension_numbers<[1], [0], [0], [1], [0, 0, 1, 1], [], []>} : vector<128x128xbf16>, vector<128x128xbf16>, vector<128x128xf32> -> vector<128x128xf32>
    %c0_12 = arith.constant 0 : index
    %c128 = arith.constant 128 : index
    %c0_13 = arith.constant 0 : index
    %15 = vector.load %arg4[%c0_12, %c128, %c0_13] : memref<4x256x128xbf16, #tpu.memory_space<vmem>>, vector<1x128x128xbf16>
    %16 = vector.shape_cast %15 : vector<1x128x128xbf16> to vector<128x128xbf16>
    %cst_14 = arith.constant dense<0.000000e+00> : vector<128x128xf32>
    %17 = tpu.matmul %8, %16, %cst_14 {dimension_numbers = #tpu.dot_dimension_numbers<[1], [0], [0], [1], [0, 0, 1, 1], [], []>} : vector<128x128xbf16>, vector<128x128xbf16>, vector<128x128xf32> -> vector<128x128xf32>
    %18 = arith.addf %14, %17 : vector<128x128xf32>
    %cst_15 = arith.constant 0.000000e+00 : f32
    %19 = vector.broadcast %cst_15 : f32 to vector<128x128xf32>
    %20 = arith.maximumf %18, %19 : vector<128x128xf32>
    %21 = arith.truncf %20 : vector<128x128xf32> to vector<128x128xbf16>
    %c0_16 = arith.constant 0 : index
    %c0_17 = arith.constant 0 : index
    %22 = vector.load %arg2[%c0_16, %c0_17] : memref<128x128xbf16, #tpu.memory_space<vmem>>, vector<128x128xbf16>
    %cst_18 = arith.constant dense<0.000000e+00> : vector<128x128xf32>
    %23 = tpu.matmul %22, %21, %cst_18 {dimension_numbers = #tpu.dot_dimension_numbers<[1], [0], [0], [1], [0, 0, 1, 1], [], []>} : vector<128x128xbf16>, vector<128x128xbf16>, vector<128x128xf32> -> vector<128x128xf32>
    %24 = arith.truncf %23 : vector<128x128xf32> to vector<128x128xbf16>
    %c1 = arith.constant 1 : index
    %c0_19 = arith.constant 0 : index
    %c0_20 = arith.constant 0 : index
    %25 = vector.load %arg4[%c1, %c0_19, %c0_20] : memref<4x256x128xbf16, #tpu.memory_space<vmem>>, vector<1x128x128xbf16>
    %26 = vector.shape_cast %25 : vector<1x128x128xbf16> to vector<128x128xbf16>
    %cst_21 = arith.constant dense<0.000000e+00> : vector<128x128xf32>
    %27 = tpu.matmul %24, %26, %cst_21 {dimension_numbers = #tpu.dot_dimension_numbers<[1], [0], [0], [1], [0, 0, 1, 1], [], []>} : vector<128x128xbf16>, vector<128x128xbf16>, vector<128x128xf32> -> vector<128x128xf32>
    %c1_22 = arith.constant 1 : index
    %c128_23 = arith.constant 128 : index
    %c0_24 = arith.constant 0 : index
    %28 = vector.load %arg4[%c1_22, %c128_23, %c0_24] : memref<4x256x128xbf16, #tpu.memory_space<vmem>>, vector<1x128x128xbf16>
    %29 = vector.shape_cast %28 : vector<1x128x128xbf16> to vector<128x128xbf16>
    %cst_25 = arith.constant dense<0.000000e+00> : vector<128x128xf32>
    %30 = tpu.matmul %8, %29, %cst_25 {dimension_numbers = #tpu.dot_dimension_numbers<[1], [0], [0], [1], [0, 0, 1, 1], [], []>} : vector<128x128xbf16>, vector<128x128xbf16>, vector<128x128xf32> -> vector<128x128xf32>
    %31 = arith.addf %27, %30 : vector<128x128xf32>
    %cst_26 = arith.constant 0.000000e+00 : f32
    %32 = vector.broadcast %cst_26 : f32 to vector<128x128xf32>
    %33 = arith.maximumf %31, %32 : vector<128x128xf32>
    %34 = arith.truncf %33 : vector<128x128xf32> to vector<128x128xbf16>
    %c0_27 = arith.constant 0 : index
    %c0_28 = arith.constant 0 : index
    %35 = vector.load %arg2[%c0_27, %c0_28] : memref<128x128xbf16, #tpu.memory_space<vmem>>, vector<128x128xbf16>
    %cst_29 = arith.constant dense<0.000000e+00> : vector<128x128xf32>
    %36 = tpu.matmul %35, %34, %cst_29 {dimension_numbers = #tpu.dot_dimension_numbers<[1], [0], [0], [1], [0, 0, 1, 1], [], []>} : vector<128x128xbf16>, vector<128x128xbf16>, vector<128x128xf32> -> vector<128x128xf32>
    %37 = arith.truncf %36 : vector<128x128xf32> to vector<128x128xbf16>
    %c2 = arith.constant 2 : index
    %c0_30 = arith.constant 0 : index
    %c0_31 = arith.constant 0 : index
    %38 = vector.load %arg4[%c2, %c0_30, %c0_31] : memref<4x256x128xbf16, #tpu.memory_space<vmem>>, vector<1x128x128xbf16>
    %39 = vector.shape_cast %38 : vector<1x128x128xbf16> to vector<128x128xbf16>
    %cst_32 = arith.constant dense<0.000000e+00> : vector<128x128xf32>
    %40 = tpu.matmul %37, %39, %cst_32 {dimension_numbers = #tpu.dot_dimension_numbers<[1], [0], [0], [1], [0, 0, 1, 1], [], []>} : vector<128x128xbf16>, vector<128x128xbf16>, vector<128x128xf32> -> vector<128x128xf32>
    %c2_33 = arith.constant 2 : index
    %c128_34 = arith.constant 128 : index
    %c0_35 = arith.constant 0 : index
    %41 = vector.load %arg4[%c2_33, %c128_34, %c0_35] : memref<4x256x128xbf16, #tpu.memory_space<vmem>>, vector<1x128x128xbf16>
    %42 = vector.shape_cast %41 : vector<1x128x128xbf16> to vector<128x128xbf16>
    %cst_36 = arith.constant dense<0.000000e+00> : vector<128x128xf32>
    %43 = tpu.matmul %8, %42, %cst_36 {dimension_numbers = #tpu.dot_dimension_numbers<[1], [0], [0], [1], [0, 0, 1, 1], [], []>} : vector<128x128xbf16>, vector<128x128xbf16>, vector<128x128xf32> -> vector<128x128xf32>
    %44 = arith.addf %40, %43 : vector<128x128xf32>
    %cst_37 = arith.constant 0.000000e+00 : f32
    %45 = vector.broadcast %cst_37 : f32 to vector<128x128xf32>
    %46 = arith.maximumf %44, %45 : vector<128x128xf32>
    %47 = arith.truncf %46 : vector<128x128xf32> to vector<128x128xbf16>
    %c0_38 = arith.constant 0 : index
    %c0_39 = arith.constant 0 : index
    %48 = vector.load %arg2[%c0_38, %c0_39] : memref<128x128xbf16, #tpu.memory_space<vmem>>, vector<128x128xbf16>
    %cst_40 = arith.constant dense<0.000000e+00> : vector<128x128xf32>
    %49 = tpu.matmul %48, %47, %cst_40 {dimension_numbers = #tpu.dot_dimension_numbers<[1], [0], [0], [1], [0, 0, 1, 1], [], []>} : vector<128x128xbf16>, vector<128x128xbf16>, vector<128x128xf32> -> vector<128x128xf32>
    %50 = arith.truncf %49 : vector<128x128xf32> to vector<128x128xbf16>
    %c3 = arith.constant 3 : index
    %c0_41 = arith.constant 0 : index
    %c0_42 = arith.constant 0 : index
    %51 = vector.load %arg4[%c3, %c0_41, %c0_42] : memref<4x256x128xbf16, #tpu.memory_space<vmem>>, vector<1x128x128xbf16>
    %52 = vector.shape_cast %51 : vector<1x128x128xbf16> to vector<128x128xbf16>
    %cst_43 = arith.constant dense<0.000000e+00> : vector<128x128xf32>
    %53 = tpu.matmul %50, %52, %cst_43 {dimension_numbers = #tpu.dot_dimension_numbers<[1], [0], [0], [1], [0, 0, 1, 1], [], []>} : vector<128x128xbf16>, vector<128x128xbf16>, vector<128x128xf32> -> vector<128x128xf32>
    %c3_44 = arith.constant 3 : index
    %c128_45 = arith.constant 128 : index
    %c0_46 = arith.constant 0 : index
    %54 = vector.load %arg4[%c3_44, %c128_45, %c0_46] : memref<4x256x128xbf16, #tpu.memory_space<vmem>>, vector<1x128x128xbf16>
    %55 = vector.shape_cast %54 : vector<1x128x128xbf16> to vector<128x128xbf16>
    %cst_47 = arith.constant dense<0.000000e+00> : vector<128x128xf32>
    %56 = tpu.matmul %8, %55, %cst_47 {dimension_numbers = #tpu.dot_dimension_numbers<[1], [0], [0], [1], [0, 0, 1, 1], [], []>} : vector<128x128xbf16>, vector<128x128xbf16>, vector<128x128xf32> -> vector<128x128xf32>
    %57 = arith.addf %53, %56 : vector<128x128xf32>
    %cst_48 = arith.constant 0.000000e+00 : f32
    %58 = vector.broadcast %cst_48 : f32 to vector<128x128xf32>
    %59 = arith.maximumf %57, %58 : vector<128x128xf32>
    %60 = arith.truncf %59 : vector<128x128xf32> to vector<128x128xbf16>
    %c0_49 = arith.constant 0 : index
    %c0_50 = arith.constant 0 : index
    %61 = vector.load %arg5[%c0_49, %c0_50] : memref<128x128xbf16, #tpu.memory_space<vmem>>, vector<128x128xbf16>
    %cst_51 = arith.constant dense<0.000000e+00> : vector<128x128xf32>
    %62 = tpu.matmul %60, %61, %cst_51 {dimension_numbers = #tpu.dot_dimension_numbers<[1], [0], [0], [1], [0, 0, 1, 1], [], []>} : vector<128x128xbf16>, vector<128x128xbf16>, vector<128x128xf32> -> vector<128x128xf32>
    %c0_52 = arith.constant 0 : index
    %c0_53 = arith.constant 0 : index
    %63 = vector.load %arg6[%c0_52, %c0_53] : memref<1x128xf32, #tpu.memory_space<vmem>>, vector<1x128xf32>
    %64 = vector.broadcast %63 : vector<1x128xf32> to vector<128x128xf32>
    %65 = arith.addf %62, %64 : vector<128x128xf32>
    %c0_54 = arith.constant 0 : index
    %c0_55 = arith.constant 0 : index
    %66 = vector.load %arg7[%c0_54, %c0_55] : memref<128x128xf32, #tpu.memory_space<vmem>>, vector<128x128xf32>
    tpu.vector_store %arg7[%c0_54, %c0_55], %65 {strides = array<i32>} : memref<128x128xf32, #tpu.memory_space<vmem>>, vector<128x128xf32>,
    return
  }
  func.func @transform_0(%arg0: i32) -> (i32, i32) {
    %c0_i32 = arith.constant 0 : i32
    %c0_i32_0 = arith.constant 0 : i32
    %c0_i32_1 = arith.constant 0 : i32
    return %c0_i32, %c0_i32_0 : i32, i32
  }
  func.func @transform_1(%arg0: i32) -> (i32, i32) {
    %c0_i32 = arith.constant 0 : i32
    %c0_i32_0 = arith.constant 0 : i32
    %c0_i32_1 = arith.constant 0 : i32
    return %c0_i32, %c0_i32_0 : i32, i32
  }
  func.func @transform_2(%arg0: i32) -> (i32, i32) {
    %c0_i32 = arith.constant 0 : i32
    %c0_i32_0 = arith.constant 0 : i32
    %c0_i32_1 = arith.constant 0 : i32
    return %c0_i32, %c0_i32_0 : i32, i32
  }
  func.func @transform_3(%arg0: i32) -> (i32, i32, i32) {
    %c0_i32 = arith.constant 0 : i32
    %c0_i32_0 = arith.constant 0 : i32
    %c0_i32_1 = arith.constant 0 : i32
    %c0_i32_2 = arith.constant 0 : i32
    return %c0_i32, %c0_i32_0, %c0_i32_1 : i32, i32, i32
  }
  func.func @transform_4(%arg0: i32) -> (i32, i32) {
    %c0_i32 = arith.constant 0 : i32
    %c0_i32_0 = arith.constant 0 : i32
    %c0_i32_1 = arith.constant 0 : i32
    return %c0_i32, %c0_i32_0 : i32, i32
  }
  func.func @transform_5(%arg0: i32) -> (i32, i32) {
    %c0_i32 = arith.constant 0 : i32
    %c0_i32_0 = arith.constant 0 : i32
    %c0_i32_1 = arith.constant 0 : i32
    return %c0_i32, %c0_i32_0 : i32, i32
  }
  func.func @transform_6(%arg0: i32) -> (i32, i32) {
    %c0_i32 = arith.constant 0 : i32
    %c0_i32_0 = arith.constant 0 : i32
    %c0_i32_1 = arith.constant 0 : i32
    return %c0_i32, %c0_i32_0 : i32, i32
  }
}

</mosaic_0001>

<llo_original>
// kernel: tpu_custom_call.1
$region0: #{tpu_custom_call.1}
  #allocation0 [shape = 'u32[]', space=smem, size = 0x4, offset = 0x4, fixed_abs, tag = 'smem constant byte address 0x4 - core index']
  #allocation1 [shape = 'u32[144,128]{1,0:T(1,128)}', space=vmem, size = 0x12000, scoped, tag = 'internal scratch']
  %s0 = inlined_call_operand.hbm [shape: bf16[128,256], index: 0, kind: input, shape index: {}]
  %s1 = inlined_call_operand.hbm [shape: bf16[128,128], index: 1, kind: input, shape index: {}]
  %s2 = inlined_call_operand.hbm [shape: bf16[256,128], index: 2, kind: input, shape index: {}]
  %s3 = inlined_call_operand.hbm [shape: bf16[4,256,128], index: 3, kind: input, shape index: {}]
  %s4 = inlined_call_operand.hbm [shape: bf16[128,128], index: 4, kind: input, shape index: {}]
  %s5 = inlined_call_operand.vmem [shape: f32[1,128], index: 5, kind: input, shape index: {}]
  %s6 = inlined_call_operand.hbm [shape: f32[128,128], index: 6, kind: output, shape index: {}]
  %s7 = sld [smem:[#allocation0]]
  $region54: #{tpu_custom_call.1} parent=0
    _
  %s9 = ssub.s32 1, %s7
  %s10 = scalar_select 0, %s9, %s7
  $region1: #{tpu_custom_call.1} parent=0
    #allocation2 [shape = 'u8[65536]{0}', space=vmem, size = 0x10000, scoped, tag = 'input window, operand 0, single buffered']
    #allocation3 [shape = 's32[1]{0}', space=sflag, size = 0x4, scoped, tag = 'scoped memory for tpu_custom_call.1']
    #allocation4 [shape = 's32[1]{0}', space=sflag, size = 0x4, scoped, tag = 'scoped memory for tpu_custom_call.1']
    #allocation5 [shape = 'u8[32768]{0}', space=vmem, size = 0x8000, scoped, tag = 'input window, operand 1, single buffered']
    #allocation6 [shape = 's32[1]{0}', space=sflag, size = 0x4, scoped, tag = 'scoped memory for tpu_custom_call.1']
    #allocation7 [shape = 'u8[65536]{0}', space=vmem, size = 0x10000, scoped, tag = 'input window, operand 2, single buffered']
    #allocation8 [shape = 'u8[262144]{0}', space=vmem, size = 0x40000, scoped, tag = 'input window, operand 3, single buffered']
    #allocation9 [shape = 's32[1]{0}', space=sflag, size = 0x4, scoped, tag = 'scoped memory for tpu_custom_call.1']
    #allocation10 [shape = 'u8[32768]{0}', space=vmem, size = 0x8000, scoped, tag = 'input window, operand 4, single buffered']
    #allocation11 [shape = 'u8[65536]{0}', space=vmem, size = 0x10000, scoped, tag = 'output window, operand 0, single buffered']
    %11 = vsyncpa [#allocation3], 0
    %12 = vsyncpa [#allocation6], 0
    %13 = vsyncpa [#allocation9], 0
    %14 = vsyncpa [#allocation4], 0
    // Predicated region
    $region2: #{tpu_custom_call.1} parent=1 // pred_check
      _
    $region3: #{tpu_custom_call.1} parent=1 // pred_check_branch
      %16 = sbr.rel (0) target = $region5
    $region4: #{tpu_custom_call.1} parent=1 // pred_region
      %s18 = ssub.s32 2048, 2048
      %19 = vsyncadd [#allocation3], %s18
      %s20 = sshll.u32 [#allocation2], 4
      %s21 = int_to_ptr.vmem [resolvable:$true] %s20
      %26 = dma.hbm_to_vmem [thread:$0]  %s0, 2048, %s21, [#allocation3], 128, 128, 8
    $region5: #{tpu_custom_call.1} parent=1 // pred_fallthru
      _
    // Predicated region
    $region6: #{tpu_custom_call.1} parent=1 // pred_check
      _
    $region7: #{tpu_custom_call.1} parent=1 // pred_check_branch
      %28 = sbr.rel (0) target = $region9
    $region8: #{tpu_custom_call.1} parent=1 // pred_region
      %s30 = ssub.s32 1024, 1024
      %31 = vsyncadd [#allocation6], %s30
      %s32 = sshll.u32 [#allocation5], 4
      %s33 = int_to_ptr.vmem [resolvable:$true] %s32
      %38 = dma.hbm_to_vmem [thread:$0]  %s1, 1024, %s33, [#allocation6], 64, 64, 4
    $region9: #{tpu_custom_call.1} parent=1 // pred_fallthru
      _
    // Predicated region
    $region10: #{tpu_custom_call.1} parent=1 // pred_check
      _
    $region11: #{tpu_custom_call.1} parent=1 // pred_check_branch
      %40 = sbr.rel (0) target = $region13
    $region12: #{tpu_custom_call.1} parent=1 // pred_region
      %s42 = ssub.s32 2048, 2048
      %43 = vsyncadd [#allocation6], %s42
      %s44 = sshll.u32 [#allocation7], 4
      %s45 = int_to_ptr.vmem [resolvable:$true] %s44
      %50 = dma.hbm_to_vmem [thread:$0]  %s2, 2048, %s45, [#allocation6], 64, 64, 4
    $region13: #{tpu_custom_call.1} parent=1 // pred_fallthru
      _
    // Predicated region
    $region14: #{tpu_custom_call.1} parent=1 // pred_check
      _
    $region15: #{tpu_custom_call.1} parent=1 // pred_check_branch
      %52 = sbr.rel (0) target = $region17
    $region16: #{tpu_custom_call.1} parent=1 // pred_region
      %s54 = ssub.s32 8192, 8192
      %55 = vsyncadd [#allocation9], %s54
      %s56 = sshll.u32 [#allocation8], 4
      %s57 = int_to_ptr.vmem [resolvable:$true] %s56
      %62 = dma.hbm_to_vmem [thread:$0]  %s3, 8192, %s57, [#allocation9], 64, 64, 4
    $region17: #{tpu_custom_call.1} parent=1 // pred_fallthru
      _
    // Predicated region
    $region18: #{tpu_custom_call.1} parent=1 // pred_check
      _
    $region19: #{tpu_custom_call.1} parent=1 // pred_check_branch
      %64 = sbr.rel (0) target = $region21
    $region20: #{tpu_custom_call.1} parent=1 // pred_region
      %s66 = ssub.s32 1024, 1024
      %67 = vsyncadd [#allocation9], %s66
      %s68 = sshll.u32 [#allocation10], 4
      %s69 = int_to_ptr.vmem [resolvable:$true] %s68
      %74 = dma.hbm_to_vmem [thread:$0]  %s4, 1024, %s69, [#allocation9], 64, 64, 4
    $region21: #{tpu_custom_call.1} parent=1 // pred_fallthru
      _
    // Predicated region
    $region22: #{tpu_custom_call.1} parent=1 // pred_check
      _
    $region23: #{tpu_custom_call.1} parent=1 // pred_check_branch
      %76 = sbr.rel (0) target = $region25
    $region24: #{tpu_custom_call.1} parent=1 // pred_region
      _
    $region25: #{tpu_custom_call.1} parent=1 // pred_fallthru
      _
    // Predicated region
    $region26: #{tpu_custom_call.1} parent=1 // pred_check
      _
    $region27: #{tpu_custom_call.1} parent=1 // pred_check_branch
      %78 = sbr.rel (0) target = $region29
    $region28: #{tpu_custom_call.1} parent=1 // pred_region
      %79 = dma.done [#allocation3], 2048
    $region29: #{tpu_custom_call.1} parent=1 // pred_fallthru
      _
    // Predicated region
    $region30: #{tpu_custom_call.1} parent=1 // pred_check
      _
    $region31: #{tpu_custom_call.1} parent=1 // pred_check_branch
      %81 = sbr.rel (0) target = $region33
    $region32: #{tpu_custom_call.1} parent=1 // pred_region
      %82 = dma.done [#allocation6], 1024
    $region33: #{tpu_custom_call.1} parent=1 // pred_fallthru
      _
    // Predicated region
    $region34: #{tpu_custom_call.1} parent=1 // pred_check
      _
    $region35: #{tpu_custom_call.1} parent=1 // pred_check_branch
      %84 = sbr.rel (0) target = $region37
    $region36: #{tpu_custom_call.1} parent=1 // pred_region
      %85 = dma.done [#allocation6], 2048
    $region37: #{tpu_custom_call.1} parent=1 // pred_fallthru
      _
    // Predicated region
    $region38: #{tpu_custom_call.1} parent=1 // pred_check
      _
    $region39: #{tpu_custom_call.1} parent=1 // pred_check_branch
      %87 = sbr.rel (0) target = $region41
    $region40: #{tpu_custom_call.1} parent=1 // pred_region
      %88 = dma.done [#allocation9], 8192
    $region41: #{tpu_custom_call.1} parent=1 // pred_fallthru
      _
    // Predicated region
    $region42: #{tpu_custom_call.1} parent=1 // pred_check
      _
    $region43: #{tpu_custom_call.1} parent=1 // pred_check_branch
      %90 = sbr.rel (0) target = $region45
    $region44: #{tpu_custom_call.1} parent=1 // pred_region
      %91 = dma.done [#allocation9], 1024
    $region45: #{tpu_custom_call.1} parent=1 // pred_fallthru
      _
    %v93 = vld [vmem:[#allocation2] sm:$0xff]
    %v94 = vld [vmem:[#allocation2 + $0x8] sm:$0xff]
    %v95 = vld [vmem:[#allocation2 + $0x10] sm:$0xff]
    %v96 = vld [vmem:[#allocation2 + $0x18] sm:$0xff]
    %v97 = vld [vmem:[#allocation2 + $0x20] sm:$0xff]
    %v98 = vld [vmem:[#allocation2 + $0x28] sm:$0xff]
    %v99 = vld [vmem:[#allocation2 + $0x30] sm:$0xff]
    %v100 = vld [vmem:[#allocation2 + $0x38] sm:$0xff]
    %v101 = vld [vmem:[#allocation2 + $0x40] sm:$0xff]
    %v102 = vld [vmem:[#allocation2 + $0x48] sm:$0xff]
    %v103 = vld [vmem:[#allocation2 + $0x50] sm:$0xff]
    %v104 = vld [vmem:[#allocation2 + $0x58] sm:$0xff]
    %v105 = vld [vmem:[#allocation2 + $0x60] sm:$0xff]
    %v106 = vld [vmem:[#allocation2 + $0x68] sm:$0xff]
    %v107 = vld [vmem:[#allocation2 + $0x70] sm:$0xff]
    %v108 = vld [vmem:[#allocation2 + $0x78] sm:$0xff]
    %v109 = vld [vmem:[#allocation7] sm:$0xf]
    %v110 = vld [vmem:[#allocation7 + $0x4] sm:$0xf]
    %v111 = vld [vmem:[#allocation7 + $0x8] sm:$0xf]
    %v112 = vld [vmem:[#allocation7 + $0xc] sm:$0xf]
    %v113 = vld [vmem:[#allocation7 + $0x10] sm:$0xf]
    %v114 = vld [vmem:[#allocation7 + $0x14] sm:$0xf]
    %v115 = vld [vmem:[#allocation7 + $0x18] sm:$0xf]
    %v116 = vld [vmem:[#allocation7 + $0x1c] sm:$0xf]
    %v117 = vld [vmem:[#allocation7 + $0x20] sm:$0xf]
    %v118 = vld [vmem:[#allocation7 + $0x24] sm:$0xf]
    %v119 = vld [vmem:[#allocation7 + $0x28] sm:$0xf]
    %v120 = vld [vmem:[#allocation7 + $0x2c] sm:$0xf]
    %v121 = vld [vmem:[#allocation7 + $0x30] sm:$0xf]
    %v122 = vld [vmem:[#allocation7 + $0x34] sm:$0xf]
    %v123 = vld [vmem:[#allocation7 + $0x38] sm:$0xf]
    %v124 = vld [vmem:[#allocation7 + $0x3c] sm:$0xf]
    %v125 = vld [vmem:[#allocation7 + $0x40] sm:$0xf]
    %v126 = vld [vmem:[#allocation7 + $0x44] sm:$0xf]
    %v127 = vld [vmem:[#allocation7 + $0x48] sm:$0xf]
    %v128 = vld [vmem:[#allocation7 + $0x4c] sm:$0xf]
    %v129 = vld [vmem:[#allocation7 + $0x50] sm:$0xf]
    %v130 = vld [vmem:[#allocation7 + $0x54] sm:$0xf]
    %v131 = vld [vmem:[#allocation7 + $0x58] sm:$0xf]
    %v132 = vld [vmem:[#allocation7 + $0x5c] sm:$0xf]
    %v133 = vld [vmem:[#allocation7 + $0x60] sm:$0xf]
    %v134 = vld [vmem:[#allocation7 + $0x64] sm:$0xf]
    %v135 = vld [vmem:[#allocation7 + $0x68] sm:$0xf]
    %v136 = vld [vmem:[#allocation7 + $0x6c] sm:$0xf]
    %v137 = vld [vmem:[#allocation7 + $0x70] sm:$0xf]
    %v138 = vld [vmem:[#allocation7 + $0x74] sm:$0xf]
    %v139 = vld [vmem:[#allocation7 + $0x78] sm:$0xf]
    %v140 = vld [vmem:[#allocation7 + $0x7c] sm:$0xf]
    %v157 = vunpack.c.l.b16 %v93
    %v158 = vunpack.c.h.b16 %v93
    %v159 = vunpack.c.l.b16 %v94
    %v160 = vunpack.c.h.b16 %v94
    %v161 = vunpack.c.l.b16 %v95
    %v162 = vunpack.c.h.b16 %v95
    %v163 = vunpack.c.l.b16 %v96
    %v164 = vunpack.c.h.b16 %v96
    %v165 = vunpack.c.l.b16 %v97
    %v166 = vunpack.c.h.b16 %v97
    %v167 = vunpack.c.l.b16 %v98
    %v168 = vunpack.c.h.b16 %v98
    %v169 = vunpack.c.l.b16 %v99
    %v170 = vunpack.c.h.b16 %v99
    %v171 = vunpack.c.l.b16 %v100
    %v172 = vunpack.c.h.b16 %v100
    %v173 = vunpack.c.l.b16 %v101
    %v174 = vunpack.c.h.b16 %v101
    %v175 = vunpack.c.l.b16 %v102
    %v176 = vunpack.c.h.b16 %v102
    %v177 = vunpack.c.l.b16 %v103
    %v178 = vunpack.c.h.b16 %v103
    %v179 = vunpack.c.l.b16 %v104
    %v180 = vunpack.c.h.b16 %v104
    %v181 = vunpack.c.l.b16 %v105
    %v182 = vunpack.c.h.b16 %v105
    %v183 = vunpack.c.l.b16 %v106
    %v184 = vunpack.c.h.b16 %v106
    %v185 = vunpack.c.l.b16 %v107
    %v186 = vunpack.c.h.b16 %v107
    %v187 = vunpack.c.l.b16 %v108
    %v188 = vunpack.c.h.b16 %v108
    %v189 = vpack.c.b16 %v159, %v157
    %v190 = vpack.c.b16 %v160, %v158
    %v191 = vpack.c.b16 %v163, %v161
    %v192 = vpack.c.b16 %v164, %v162
    %v193 = vpack.c.b16 %v167, %v165
    %v194 = vpack.c.b16 %v168, %v166
    %v195 = vpack.c.b16 %v171, %v169
    %v196 = vpack.c.b16 %v172, %v170
    %v197 = vpack.c.b16 %v175, %v173
    %v198 = vpack.c.b16 %v176, %v174
    %v199 = vpack.c.b16 %v179, %v177
    %v200 = vpack.c.b16 %v180, %v178
    %v201 = vpack.c.b16 %v183, %v181
    %v202 = vpack.c.b16 %v184, %v182
    %v203 = vpack.c.b16 %v187, %v185
    %v204 = vpack.c.b16 %v188, %v186
    %v253 = vunpack.c.l.b16 %v109
    %v254 = vunpack.c.l.b16 %v110
    %v255 = vunpack.c.l.b16 %v111
    %v256 = vunpack.c.l.b16 %v112
    %v257 = vunpack.c.l.b16 %v113
    %v258 = vunpack.c.l.b16 %v114
    %v259 = vunpack.c.l.b16 %v115
    %v260 = vunpack.c.l.b16 %v116
    %v261 = vunpack.c.l.b16 %v117
    %v262 = vunpack.c.l.b16 %v118
    %v263 = vunpack.c.l.b16 %v119
    %v264 = vunpack.c.l.b16 %v120
    %v265 = vunpack.c.l.b16 %v121
    %v266 = vunpack.c.l.b16 %v122
    %v267 = vunpack.c.l.b16 %v123
    %v268 = vunpack.c.l.b16 %v124
    %v269 = vunpack.c.l.b16 %v125
    %v270 = vunpack.c.l.b16 %v126
    %v271 = vunpack.c.l.b16 %v127
    %v272 = vunpack.c.l.b16 %v128
    %v273 = vunpack.c.l.b16 %v129
    %v274 = vunpack.c.l.b16 %v130
    %v275 = vunpack.c.l.b16 %v131
    %v276 = vunpack.c.l.b16 %v132
    %v277 = vunpack.c.l.b16 %v133
    %v278 = vunpack.c.l.b16 %v134
    %v279 = vunpack.c.l.b16 %v135
    %v280 = vunpack.c.l.b16 %v136
    %v281 = vunpack.c.l.b16 %v137
    %v282 = vunpack.c.l.b16 %v138
    %v283 = vunpack.c.l.b16 %v139
    %v284 = vunpack.c.l.b16 %v140
    %v285 = vpack.c.b16 %v254, %v253
    %v286 = vpack.c.b16 %v256, %v255
    %v287 = vpack.c.b16 %v258, %v257
    %v288 = vpack.c.b16 %v260, %v259
    %v289 = vpack.c.b16 %v262, %v261
    %v290 = vpack.c.b16 %v264, %v263
    %v291 = vpack.c.b16 %v266, %v265
    %v292 = vpack.c.b16 %v268, %v267
    %v293 = vpack.c.b16 %v270, %v269
    %v294 = vpack.c.b16 %v272, %v271
    %v295 = vpack.c.b16 %v274, %v273
    %v296 = vpack.c.b16 %v276, %v275
    %v297 = vpack.c.b16 %v278, %v277
    %v298 = vpack.c.b16 %v280, %v279
    %v299 = vpack.c.b16 %v282, %v281
    %v300 = vpack.c.b16 %v284, %v283
    %317 = vmatprep.subr.bf16.mxu0 0
    %318 = vmatpush1.bf16.msra.mxu0 %v285
    %319 = vmatprep.subr.bf16.mxu0 0
    %320 = vmatpush1.bf16.msra.mxu0 %v286
    %321 = vmatprep.subr.bf16.mxu0 0
    %322 = vmatpush1.bf16.msra.mxu0 %v287
    %323 = vmatprep.subr.bf16.mxu0 0
    %324 = vmatpush1.bf16.msra.mxu0 %v288
    %325 = vmatprep.subr.bf16.mxu0 0
    %326 = vmatpush1.bf16.msra.mxu0 %v289
    %327 = vmatprep.subr.bf16.mxu0 0
    %328 = vmatpush1.bf16.msra.mxu0 %v290
    %329 = vmatprep.subr.bf16.mxu0 0
    %330 = vmatpush1.bf16.msra.mxu0 %v291
    %331 = vmatprep.subr.bf16.mxu0 0
    %332 = vmatpush1.bf16.msra.mxu0 %v292
    %333 = vmatprep.subr.bf16.mxu0 0
    %334 = vmatpush1.bf16.msra.mxu0 %v293
    %335 = vmatprep.subr.bf16.mxu0 0
    %336 = vmatpush1.bf16.msra.mxu0 %v294
    %337 = vmatprep.subr.bf16.mxu0 0
    %338 = vmatpush1.bf16.msra.mxu0 %v295
    %339 = vmatprep.subr.bf16.mxu0 0
    %340 = vmatpush1.bf16.msra.mxu0 %v296
    %341 = vmatprep.subr.bf16.mxu0 0
    %342 = vmatpush1.bf16.msra.mxu0 %v297
    %343 = vmatprep.subr.bf16.mxu0 0
    %344 = vmatpush1.bf16.msra.mxu0 %v298
    %345 = vmatprep.subr.bf16.mxu0 0
    %346 = vmatpush1.bf16.msra.mxu0 %v299
    %347 = vmatprep.subr.bf16.mxu0 0
    %348 = vmatpush1.bf16.msra.mxu0 %v300
    %349 = vmatprep.mubr.bf16.mxu0 %v190
    %350 = vmatmul.mubr.bf16.gmra.mrb[0].mxu0 %v189
    %v351 = vpop.f32.mrb[0].mxu0
    %v352 = vadd.f32 0.0, %v351
    %v353 = vpop.f32.mrb[0].mxu0
    %v354 = vpop.f32.mrb[0].mxu0
    %v355 = vadd.f32 0.0, %v354
    %v356 = vpop.f32.mrb[0].mxu0
    %357 = vmatprep.mubr.bf16.mxu0 %v192
    %358 = vmatmul.mubr.bf16.gmra.mrb[0].mxu0 %v191
    %v359 = vpop.f32.mrb[0].mxu0
    %v360 = vadd.f32 0.0, %v359
    %v361 = vpop.f32.mrb[0].mxu0
    %v362 = vpop.f32.mrb[0].mxu0
    %v363 = vadd.f32 0.0, %v362
    %v364 = vpop.f32.mrb[0].mxu0
    %365 = vmatprep.mubr.bf16.mxu0 %v194
    %366 = vmatmul.mubr.bf16.gmra.mrb[0].mxu0 %v193
    %v367 = vpop.f32.mrb[0].mxu0
    %v368 = vadd.f32 0.0, %v367
    %v369 = vpop.f32.mrb[0].mxu0
    %v370 = vpop.f32.mrb[0].mxu0
    %v371 = vadd.f32 0.0, %v370
    %v372 = vpop.f32.mrb[0].mxu0
    %373 = vmatprep.mubr.bf16.mxu0 %v196
    %374 = vmatmul.mubr.bf16.gmra.mrb[0].mxu0 %v195
    %v375 = vpop.f32.mrb[0].mxu0
    %v376 = vadd.f32 0.0, %v375
    %v377 = vpop.f32.mrb[0].mxu0
    %v378 = vpop.f32.mrb[0].mxu0
    %v379 = vadd.f32 0.0, %v378
    %v380 = vpop.f32.mrb[0].mxu0
    %381 = vmatprep.mubr.bf16.mxu0 %v198
    %382 = vmatmul.mubr.bf16.gmra.mrb[0].mxu0 %v197
    %v383 = vpop.f32.mrb[0].mxu0
    %v384 = vadd.f32 0.0, %v383
    %v385 = vpop.f32.mrb[0].mxu0
    %v386 = vpop.f32.mrb[0].mxu0
    %v387 = vadd.f32 0.0, %v386
    %v388 = vpop.f32.mrb[0].mxu0
    %389 = vmatprep.mubr.bf16.mxu0 %v200
    %390 = vmatmul.mubr.bf16.gmra.mrb[0].mxu0 %v199
    %v391 = vpop.f32.mrb[0].mxu0
    %v392 = vadd.f32 0.0, %v391
    %v393 = vpop.f32.mrb[0].mxu0
    %v394 = vpop.f32.mrb[0].mxu0
    %v395 = vadd.f32 0.0, %v394
    %v396 = vpop.f32.mrb[0].mxu0
    %397 = vmatprep.mubr.bf16.mxu0 %v202
    %398 = vmatmul.mubr.bf16.gmra.mrb[0].mxu0 %v201
    %v399 = vpop.f32.mrb[0].mxu0
    %v400 = vadd.f32 0.0, %v399
    %v401 = vpop.f32.mrb[0].mxu0
    %v402 = vpop.f32.mrb[0].mxu0
    %v403 = vadd.f32 0.0, %v402
    %v404 = vpop.f32.mrb[0].mxu0
    %405 = vmatprep.mubr.bf16.mxu0 %v204
    %406 = vmatmul.mubr.bf16.gmra.mrb[0].mxu0 %v203
    %v407 = vpop.f32.mrb[0].mxu0
    %v408 = vadd.f32 0.0, %v407
    %v409 = vpop.f32.mrb[0].mxu0
    %v410 = vpop.f32.mrb[0].mxu0
    %v411 = vadd.f32 0.0, %v410
    %v412 = vpop.f32.mrb[0].mxu0
    %413 = vdwg.mxu0
    %v414 = vmax.f32 %v352, 0.0
    %v415 = vmax.f32 %v355, 0.0
    %v416 = vmax.f32 %v360, 0.0
    %v417 = vmax.f32 %v363, 0.0
    %v418 = vmax.f32 %v368, 0.0
    %v419 = vmax.f32 %v371, 0.0
    %v420 = vmax.f32 %v376, 0.0
    %v421 = vmax.f32 %v379, 0.0
    %v422 = vmax.f32 %v384, 0.0
    %v423 = vmax.f32 %v387, 0.0
    %v424 = vmax.f32 %v392, 0.0
    %v425 = vmax.f32 %v395, 0.0
    %v426 = vmax.f32 %v400, 0.0
    %v427 = vmax.f32 %v403, 0.0
    %v428 = vmax.f32 %v408, 0.0
    %v429 = vmax.f32 %v411, 0.0
    %v430 = vpack.c.bf16 %v415, %v414
    %v431 = vpack.c.bf16 %v417, %v416
    %v432 = vpack.c.bf16 %v419, %v418
    %v433 = vpack.c.bf16 %v421, %v420
    %v434 = vpack.c.bf16 %v423, %v422
    %v435 = vpack.c.bf16 %v425, %v424
    %v436 = vpack.c.bf16 %v427, %v426
    %v437 = vpack.c.bf16 %v429, %v428
    %v438 = vmul.f32 %v414, 0.4
    %v439 = vmul.f32 %v415, 0.4
    %v440 = vmul.f32 %v416, 0.4
    %v441 = vmul.f32 %v417, 0.4
    %v442 = vmul.f32 %v418, 0.4
    %v443 = vmul.f32 %v419, 0.4
    %v444 = vmul.f32 %v420, 0.4
    %v445 = vmul.f32 %v421, 0.4
    %v446 = vmul.f32 %v422, 0.4
    %v447 = vmul.f32 %v423, 0.4
    %v448 = vmul.f32 %v424, 0.4
    %v449 = vmul.f32 %v425, 0.4
    %v450 = vmul.f32 %v426, 0.4
    %v451 = vmul.f32 %v427, 0.4
    %v452 = vmul.f32 %v428, 0.4
    %v453 = vmul.f32 %v429, 0.4
    %v454 = vpack.c.bf16 %v439, %v438
    %v455 = vpack.c.bf16 %v441, %v440
    %v456 = vpack.c.bf16 %v443, %v442
    %v457 = vpack.c.bf16 %v445, %v444
    %v458 = vpack.c.bf16 %v447, %v446
    %v459 = vpack.c.bf16 %v449, %v448
    %v460 = vpack.c.bf16 %v451, %v450
    %v461 = vpack.c.bf16 %v453, %v452
    %v462 = vld [vmem:[#allocation5] sm:$0xf]
    %v463 = vld [vmem:[#allocation5 + $0x4] sm:$0xf]
    %v464 = vld [vmem:[#allocation5 + $0x8] sm:$0xf]
    %v465 = vld [vmem:[#allocation5 + $0xc] sm:$0xf]
    %v466 = vld [vmem:[#allocation5 + $0x10] sm:$0xf]
    %v467 = vld [vmem:[#allocation5 + $0x14] sm:$0xf]
    %v468 = vld [vmem:[#allocation5 + $0x18] sm:$0xf]
    %v469 = vld [vmem:[#allocation5 + $0x1c] sm:$0xf]
    %v470 = vld [vmem:[#allocation5 + $0x20] sm:$0xf]
    %v471 = vld [vmem:[#allocation5 + $0x24] sm:$0xf]
    %v472 = vld [vmem:[#allocation5 + $0x28] sm:$0xf]
    %v473 = vld [vmem:[#allocation5 + $0x2c] sm:$0xf]
    %v474 = vld [vmem:[#allocation5 + $0x30] sm:$0xf]
    %v475 = vld [vmem:[#allocation5 + $0x34] sm:$0xf]
    %v476 = vld [vmem:[#allocation5 + $0x38] sm:$0xf]
    %v477 = vld [vmem:[#allocation5 + $0x3c] sm:$0xf]
    %v494 = vunpack.c.l.b16 %v462
    %v495 = vunpack.c.l.b16 %v463
    %v496 = vunpack.c.l.b16 %v464
    %v497 = vunpack.c.l.b16 %v465
    %v498 = vunpack.c.l.b16 %v466
    %v499 = vunpack.c.l.b16 %v467
    %v500 = vunpack.c.l.b16 %v468
    %v501 = vunpack.c.l.b16 %v469
    %v502 = vunpack.c.l.b16 %v470
    %v503 = vunpack.c.l.b16 %v471
    %v504 = vunpack.c.l.b16 %v472
    %v505 = vunpack.c.l.b16 %v473
    %v506 = vunpack.c.l.b16 %v474
    %v507 = vunpack.c.l.b16 %v475
    %v508 = vunpack.c.l.b16 %v476
    %v509 = vunpack.c.l.b16 %v477
    %v510 = vpack.c.b16 %v495, %v494
    %v511 = vpack.c.b16 %v497, %v496
    %v512 = vpack.c.b16 %v499, %v498
    %v513 = vpack.c.b16 %v501, %v500
    %v514 = vpack.c.b16 %v503, %v502
    %v515 = vpack.c.b16 %v505, %v504
    %v516 = vpack.c.b16 %v507, %v506
    %v517 = vpack.c.b16 %v509, %v508
    %526 = vmatprep.subr.bf16.mxu0 0
    %527 = vmatpush1.bf16.msra.mxu0 %v430
    %528 = vmatprep.subr.bf16.mxu0 0
    %529 = vmatpush1.bf16.msra.mxu0 %v431
    %530 = vmatprep.subr.bf16.mxu0 0
    %531 = vmatpush1.bf16.msra.mxu0 %v432
    %532 = vmatprep.subr.bf16.mxu0 0
    %533 = vmatpush1.bf16.msra.mxu0 %v433
    %534 = vmatprep.subr.bf16.mxu0 0
    %535 = vmatpush1.bf16.msra.mxu0 %v434
    %536 = vmatprep.subr.bf16.mxu0 0
    %537 = vmatpush1.bf16.msra.mxu0 %v435
    %538 = vmatprep.subr.bf16.mxu0 0
    %539 = vmatpush1.bf16.msra.mxu0 %v436
    %540 = vmatprep.subr.bf16.mxu0 0
    %541 = vmatpush1.bf16.msra.mxu0 %v437
    %542 = vmatprep.subr.bf16.mxu0 0
    %543 = vmatpush1.bf16.msra.mxu0 0
    %544 = vmatprep.subr.bf16.mxu0 0
    %545 = vmatpush1.bf16.msra.mxu0 0
    %546 = vmatprep.subr.bf16.mxu0 0
    %547 = vmatpush1.bf16.msra.mxu0 0
    %548 = vmatprep.subr.bf16.mxu0 0
    %549 = vmatpush1.bf16.msra.mxu0 0
    %550 = vmatprep.subr.bf16.mxu0 0
    %551 = vmatpush1.bf16.msra.mxu0 0
    %552 = vmatprep.subr.bf16.mxu0 0
    %553 = vmatpush1.bf16.msra.mxu0 0
    %554 = vmatprep.subr.bf16.mxu0 0
    %555 = vmatpush1.bf16.msra.mxu0 0
    %556 = vmatprep.subr.bf16.mxu0 0
    %557 = vmatpush1.bf16.msra.mxu0 0
    %558 = vmatprep.mubr.bf16.mxu0 0
    %559 = vmatmul.mubr.bf16.gmra.mrb[0].mxu0 %v510
    %v560 = vpop.f32.mrb[0].mxu0
    %v561 = vadd.f32 0.0, %v560
    %v562 = vpop.f32.mrb[0].mxu0
    %v563 = vpop.f32.mrb[0].mxu0
    %v564 = vadd.f32 0.0, %v563
    %v565 = vpop.f32.mrb[0].mxu0
    %566 = vmatprep.mubr.bf16.mxu0 0
    %567 = vmatmul.mubr.bf16.gmra.mrb[0].mxu0 %v511
    %v568 = vpop.f32.mrb[0].mxu0
    %v569 = vadd.f32 0.0, %v568
    %v570 = vpop.f32.mrb[0].mxu0
    %v571 = vpop.f32.mrb[0].mxu0
    %v572 = vadd.f32 0.0, %v571
    %v573 = vpop.f32.mrb[0].mxu0
    %574 = vmatprep.mubr.bf16.mxu0 0
    %575 = vmatmul.mubr.bf16.gmra.mrb[0].mxu0 %v512
    %v576 = vpop.f32.mrb[0].mxu0
    %v577 = vadd.f32 0.0, %v576
    %v578 = vpop.f32.mrb[0].mxu0
    %v579 = vpop.f32.mrb[0].mxu0
    %v580 = vadd.f32 0.0, %v579
    %v581 = vpop.f32.mrb[0].mxu0
    %582 = vmatprep.mubr.bf16.mxu0 0
    %583 = vmatmul.mubr.bf16.gmra.mrb[0].mxu0 %v513
    %v584 = vpop.f32.mrb[0].mxu0
    %v585 = vadd.f32 0.0, %v584
    %v586 = vpop.f32.mrb[0].mxu0
    %v587 = vpop.f32.mrb[0].mxu0
    %v588 = vadd.f32 0.0, %v587
    %v589 = vpop.f32.mrb[0].mxu0
    %590 = vmatprep.mubr.bf16.mxu0 0
    %591 = vmatmul.mubr.bf16.gmra.mrb[0].mxu0 %v514
    %v592 = vpop.f32.mrb[0].mxu0
    %v593 = vadd.f32 0.0, %v592
    %v594 = vpop.f32.mrb[0].mxu0
    %v595 = vpop.f32.mrb[0].mxu0
    %v596 = vadd.f32 0.0, %v595
    %v597 = vpop.f32.mrb[0].mxu0
    %598 = vmatprep.mubr.bf16.mxu0 0
    %599 = vmatmul.mubr.bf16.gmra.mrb[0].mxu0 %v515
    %v600 = vpop.f32.mrb[0].mxu0
    %v601 = vadd.f32 0.0, %v600
    %v602 = vpop.f32.mrb[0].mxu0
    %v603 = vpop.f32.mrb[0].mxu0
    %v604 = vadd.f32 0.0, %v603
    %v605 = vpop.f32.mrb[0].mxu0
    %606 = vmatprep.mubr.bf16.mxu0 0
    %607 = vmatmul.mubr.bf16.gmra.mrb[0].mxu0 %v516
    %v608 = vpop.f32.mrb[0].mxu0
    %v609 = vadd.f32 0.0, %v608
    %v610 = vpop.f32.mrb[0].mxu0
    %v611 = vpop.f32.mrb[0].mxu0
    %v612 = vadd.f32 0.0, %v611
    %v613 = vpop.f32.mrb[0].mxu0
    %614 = vmatprep.mubr.bf16.mxu0 0
    %615 = vmatmul.mubr.bf16.gmra.mrb[0].mxu0 %v517
    %v616 = vpop.f32.mrb[0].mxu0
    %v617 = vadd.f32 0.0, %v616
    %v618 = vpop.f32.mrb[0].mxu0
    %v619 = vpop.f32.mrb[0].mxu0
    %v620 = vadd.f32 0.0, %v619
    %v621 = vpop.f32.mrb[0].mxu0
    %622 = vdwg.mxu0
    %v623 = vpack.c.bf16 %v564, %v561
    %v624 = vpack.c.bf16 %v572, %v569
    %v625 = vpack.c.bf16 %v580, %v577
    %v626 = vpack.c.bf16 %v588, %v585
    %v627 = vpack.c.bf16 %v596, %v593
    %v628 = vpack.c.bf16 %v604, %v601
    %v629 = vpack.c.bf16 %v612, %v609
    %v630 = vpack.c.bf16 %v620, %v617
    %v631 = vld [vmem:[#allocation8] sm:$0xf]
    %v632 = vld [vmem:[#allocation8 + $0x4] sm:$0xf]
    %v633 = vld [vmem:[#allocation8 + $0x8] sm:$0xf]
    %v634 = vld [vmem:[#allocation8 + $0xc] sm:$0xf]
    %v635 = vld [vmem:[#allocation8 + $0x10] sm:$0xf]
    %v636 = vld [vmem:[#allocation8 + $0x14] sm:$0xf]
    %v637 = vld [vmem:[#allocation8 + $0x18] sm:$0xf]
    %v638 = vld [vmem:[#allocation8 + $0x1c] sm:$0xf]
    %v639 = vld [vmem:[#allocation8 + $0x20] sm:$0xf]
    %v640 = vld [vmem:[#allocation8 + $0x24] sm:$0xf]
    %v641 = vld [vmem:[#allocation8 + $0x28] sm:$0xf]
    %v642 = vld [vmem:[#allocation8 + $0x2c] sm:$0xf]
    %v643 = vld [vmem:[#allocation8 + $0x30] sm:$0xf]
    %v644 = vld [vmem:[#allocation8 + $0x34] sm:$0xf]
    %v645 = vld [vmem:[#allocation8 + $0x38] sm:$0xf]
    %v646 = vld [vmem:[#allocation8 + $0x3c] sm:$0xf]
    %v647 = vld [vmem:[#allocation8 + $0x40] sm:$0xf]
    %v648 = vld [vmem:[#allocation8 + $0x44] sm:$0xf]
    %v649 = vld [vmem:[#allocation8 + $0x48] sm:$0xf]
    %v650 = vld [vmem:[#allocation8 + $0x4c] sm:$0xf]
    %v651 = vld [vmem:[#allocation8 + $0x50] sm:$0xf]
    %v652 = vld [vmem:[#allocation8 + $0x54] sm:$0xf]
    %v653 = vld [vmem:[#allocation8 + $0x58] sm:$0xf]
    %v654 = vld [vmem:[#allocation8 + $0x5c] sm:$0xf]
    %v655 = vld [vmem:[#allocation8 + $0x60] sm:$0xf]
    %v656 = vld [vmem:[#allocation8 + $0x64] sm:$0xf]
    %v657 = vld [vmem:[#allocation8 + $0x68] sm:$0xf]
    %v658 = vld [vmem:[#allocation8 + $0x6c] sm:$0xf]
    %v659 = vld [vmem:[#allocation8 + $0x70] sm:$0xf]
    %v660 = vld [vmem:[#allocation8 + $0x74] sm:$0xf]
    %v661 = vld [vmem:[#allocation8 + $0x78] sm:$0xf]
    %v662 = vld [vmem:[#allocation8 + $0x7c] sm:$0xf]
    %v679 = vunpack.c.l.b16 %v647
    %v680 = vunpack.c.l.b16 %v648
    %v681 = vunpack.c.l.b16 %v649
    %v682 = vunpack.c.l.b16 %v650
    %v683 = vunpack.c.l.b16 %v651
    %v684 = vunpack.c.l.b16 %v652
    %v685 = vunpack.c.l.b16 %v653
    %v686 = vunpack.c.l.b16 %v654
    %v687 = vunpack.c.l.b16 %v655
    %v688 = vunpack.c.l.b16 %v656
    %v689 = vunpack.c.l.b16 %v657
    %v690 = vunpack.c.l.b16 %v658
    %v691 = vunpack.c.l.b16 %v659
    %v692 = vunpack.c.l.b16 %v660
    %v693 = vunpack.c.l.b16 %v661
    %v694 = vunpack.c.l.b16 %v662
    %v695 = vpack.c.b16 %v680, %v679
    %v696 = vpack.c.b16 %v682, %v681
    %v697 = vpack.c.b16 %v684, %v683
    %v698 = vpack.c.b16 %v686, %v685
    %v699 = vpack.c.b16 %v688, %v687
    %v700 = vpack.c.b16 %v690, %v689
    %v701 = vpack.c.b16 %v692, %v691
    %v702 = vpack.c.b16 %v694, %v693
    %711 = vmatprep.subr.bf16.mxu0 0
    %712 = vmatpush1.bf16.msra.mxu0 %v695
    %713 = vmatprep.subr.bf16.mxu0 0
    %714 = vmatpush1.bf16.msra.mxu0 %v696
    %715 = vmatprep.subr.bf16.mxu0 0
    %716 = vmatpush1.bf16.msra.mxu0 %v697
    %717 = vmatprep.subr.bf16.mxu0 0
    %718 = vmatpush1.bf16.msra.mxu0 %v698
    %719 = vmatprep.subr.bf16.mxu0 0
    %720 = vmatpush1.bf16.msra.mxu0 %v699
    %721 = vmatprep.subr.bf16.mxu0 0
    %722 = vmatpush1.bf16.msra.mxu0 %v700
    %723 = vmatprep.subr.bf16.mxu0 0
    %724 = vmatpush1.bf16.msra.mxu0 %v701
    %725 = vmatprep.subr.bf16.mxu0 0
    %726 = vmatpush1.bf16.msra.mxu0 %v702
    %727 = vmatprep.subr.bf16.mxu0 0
    %728 = vmatpush1.bf16.msra.mxu0 0
    %729 = vmatprep.subr.bf16.mxu0 0
    %730 = vmatpush1.bf16.msra.mxu0 0
    %731 = vmatprep.subr.bf16.mxu0 0
    %732 = vmatpush1.bf16.msra.mxu0 0
    %733 = vmatprep.subr.bf16.mxu0 0
    %734 = vmatpush1.bf16.msra.mxu0 0
    %735 = vmatprep.subr.bf16.mxu0 0
    %736 = vmatpush1.bf16.msra.mxu0 0
    %737 = vmatprep.subr.bf16.mxu0 0
    %738 = vmatpush1.bf16.msra.mxu0 0
    %739 = vmatprep.subr.bf16.mxu0 0
    %740 = vmatpush1.bf16.msra.mxu0 0
    %741 = vmatprep.subr.bf16.mxu0 0
    %742 = vmatpush1.bf16.msra.mxu0 0
    %743 = vmatprep.mubr.bf16.mxu0 0
    %744 = vmatmul.mubr.bf16.gmra.mrb[0].mxu0 %v454
    %v745 = vpop.f32.mrb[0].mxu0
    %v746 = vadd.f32 0.0, %v745
    %v747 = vpop.f32.mrb[0].mxu0
    %v748 = vpop.f32.mrb[0].mxu0
    %v749 = vadd.f32 0.0, %v748
    %v750 = vpop.f32.mrb[0].mxu0
    %751 = vmatprep.mubr.bf16.mxu0 0
    %752 = vmatmul.mubr.bf16.gmra.mrb[0].mxu0 %v455
    %v753 = vpop.f32.mrb[0].mxu0
    %v754 = vadd.f32 0.0, %v753
    %v755 = vpop.f32.mrb[0].mxu0
    %v756 = vpop.f32.mrb[0].mxu0
    %v757 = vadd.f32 0.0, %v756
    %v758 = vpop.f32.mrb[0].mxu0
    %759 = vmatprep.mubr.bf16.mxu0 0
    %760 = vmatmul.mubr.bf16.gmra.mrb[0].mxu0 %v456
    %v761 = vpop.f32.mrb[0].mxu0
    %v762 = vadd.f32 0.0, %v761
    %v763 = vpop.f32.mrb[0].mxu0
    %v764 = vpop.f32.mrb[0].mxu0
    %v765 = vadd.f32 0.0, %v764
    %v766 = vpop.f32.mrb[0].mxu0
    %767 = vmatprep.mubr.bf16.mxu0 0
    %768 = vmatmul.mubr.bf16.gmra.mrb[0].mxu0 %v457
    %v769 = vpop.f32.mrb[0].mxu0
    %v770 = vadd.f32 0.0, %v769
    %v771 = vpop.f32.mrb[0].mxu0
    %v772 = vpop.f32.mrb[0].mxu0
    %v773 = vadd.f32 0.0, %v772
    %v774 = vpop.f32.mrb[0].mxu0
    %775 = vmatprep.mubr.bf16.mxu0 0
    %776 = vmatmul.mubr.bf16.gmra.mrb[0].mxu0 %v458
    %v777 = vpop.f32.mrb[0].mxu0
    %v778 = vadd.f32 0.0, %v777
    %v779 = vpop.f32.mrb[0].mxu0
    %v780 = vpop.f32.mrb[0].mxu0
    %v781 = vadd.f32 0.0, %v780
    %v782 = vpop.f32.mrb[0].mxu0
    %783 = vmatprep.mubr.bf16.mxu0 0
    %784 = vmatmul.mubr.bf16.gmra.mrb[0].mxu0 %v459
    %v785 = vpop.f32.mrb[0].mxu0
    %v786 = vadd.f32 0.0, %v785
    %v787 = vpop.f32.mrb[0].mxu0
    %v788 = vpop.f32.mrb[0].mxu0
    %v789 = vadd.f32 0.0, %v788
    %v790 = vpop.f32.mrb[0].mxu0
    %791 = vmatprep.mubr.bf16.mxu0 0
    %792 = vmatmul.mubr.bf16.gmra.mrb[0].mxu0 %v460
    %v793 = vpop.f32.mrb[0].mxu0
    %v794 = vadd.f32 0.0, %v793
    %v795 = vpop.f32.mrb[0].mxu0
    %v796 = vpop.f32.mrb[0].mxu0
    %v797 = vadd.f32 0.0, %v796
    %v798 = vpop.f32.mrb[0].mxu0
    %799 = vmatprep.mubr.bf16.mxu0 0
    %800 = vmatmul.mubr.bf16.gmra.mrb[0].mxu0 %v461
    %v801 = vpop.f32.mrb[0].mxu0
    %v802 = vadd.f32 0.0, %v801
    %v803 = vpop.f32.mrb[0].mxu0
    %v804 = vpop.f32.mrb[0].mxu0
    %v805 = vadd.f32 0.0, %v804
    %v806 = vpop.f32.mrb[0].mxu0
    %807 = vdwg.mxu0
    %v824 = vunpack.c.l.b16 %v631
    %v825 = vunpack.c.l.b16 %v632
    %v826 = vunpack.c.l.b16 %v633
    %v827 = vunpack.c.l.b16 %v634
    %v828 = vunpack.c.l.b16 %v635
    %v829 = vunpack.c.l.b16 %v636
    %v830 = vunpack.c.l.b16 %v637
    %v831 = vunpack.c.l.b16 %v638
    %v832 = vunpack.c.l.b16 %v639
    %v833 = vunpack.c.l.b16 %v640
    %v834 = vunpack.c.l.b16 %v641
    %v835 = vunpack.c.l.b16 %v642
    %v836 = vunpack.c.l.b16 %v643
    %v837 = vunpack.c.l.b16 %v644
    %v838 = vunpack.c.l.b16 %v645
    %v839 = vunpack.c.l.b16 %v646
    %v840 = vpack.c.b16 %v825, %v824
    %v841 = vpack.c.b16 %v827, %v826
    %v842 = vpack.c.b16 %v829, %v828
    %v843 = vpack.c.b16 %v831, %v830
    %v844 = vpack.c.b16 %v833, %v832
    %v845 = vpack.c.b16 %v835, %v834
    %v846 = vpack.c.b16 %v837, %v836
    %v847 = vpack.c.b16 %v839, %v838
    %856 = vmatprep.subr.bf16.mxu0 0
    %857 = vmatpush1.bf16.msra.mxu0 %v840
    %858 = vmatprep.subr.bf16.mxu0 0
    %859 = vmatpush1.bf16.msra.mxu0 %v841
    %860 = vmatprep.subr.bf16.mxu0 0
    %861 = vmatpush1.bf16.msra.mxu0 %v842
    %862 = vmatprep.subr.bf16.mxu0 0
    %863 = vmatpush1.bf16.msra.mxu0 %v843
    %864 = vmatprep.subr.bf16.mxu0 0
    %865 = vmatpush1.bf16.msra.mxu0 %v844
    %866 = vmatprep.subr.bf16.mxu0 0
    %867 = vmatpush1.bf16.msra.mxu0 %v845
    %868 = vmatprep.subr.bf16.mxu0 0
    %869 = vmatpush1.bf16.msra.mxu0 %v846
    %870 = vmatprep.subr.bf16.mxu0 0
    %871 = vmatpush1.bf16.msra.mxu0 %v847
    %872 = vmatprep.subr.bf16.mxu0 0
    %873 = vmatpush1.bf16.msra.mxu0 0
    %874 = vmatprep.subr.bf16.mxu0 0
    %875 = vmatpush1.bf16.msra.mxu0 0
    %876 = vmatprep.subr.bf16.mxu0 0
    %877 = vmatpush1.bf16.msra.mxu0 0
    %878 = vmatprep.subr.bf16.mxu0 0
    %879 = vmatpush1.bf16.msra.mxu0 0
    %880 = vmatprep.subr.bf16.mxu0 0
    %881 = vmatpush1.bf16.msra.mxu0 0
    %882 = vmatprep.subr.bf16.mxu0 0
    %883 = vmatpush1.bf16.msra.mxu0 0
    %884 = vmatprep.subr.bf16.mxu0 0
    %885 = vmatpush1.bf16.msra.mxu0 0
    %886 = vmatprep.subr.bf16.mxu0 0
    %887 = vmatpush1.bf16.msra.mxu0 0
    %888 = vmatprep.mubr.bf16.mxu0 0
    %889 = vmatmul.mubr.bf16.gmra.mrb[0].mxu0 %v623
    %v890 = vpop.f32.mrb[0].mxu0
    %v891 = vadd.f32 %v746, %v890
    %v892 = vpop.f32.mrb[0].mxu0
    %v893 = vpop.f32.mrb[0].mxu0
    %v894 = vadd.f32 %v749, %v893
    %v895 = vpop.f32.mrb[0].mxu0
    %896 = vmatprep.mubr.bf16.mxu0 0
    %897 = vmatmul.mubr.bf16.gmra.mrb[0].mxu0 %v624
    %v898 = vpop.f32.mrb[0].mxu0
    %v899 = vadd.f32 %v754, %v898
    %v900 = vpop.f32.mrb[0].mxu0
    %v901 = vpop.f32.mrb[0].mxu0
    %v902 = vadd.f32 %v757, %v901
    %v903 = vpop.f32.mrb[0].mxu0
    %904 = vmatprep.mubr.bf16.mxu0 0
    %905 = vmatmul.mubr.bf16.gmra.mrb[0].mxu0 %v625
    %v906 = vpop.f32.mrb[0].mxu0
    %v907 = vadd.f32 %v762, %v906
    %v908 = vpop.f32.mrb[0].mxu0
    %v909 = vpop.f32.mrb[0].mxu0
    %v910 = vadd.f32 %v765, %v909
    %v911 = vpop.f32.mrb[0].mxu0
    %912 = vmatprep.mubr.bf16.mxu0 0
    %913 = vmatmul.mubr.bf16.gmra.mrb[0].mxu0 %v626
    %v914 = vpop.f32.mrb[0].mxu0
    %v915 = vadd.f32 %v770, %v914
    %v916 = vpop.f32.mrb[0].mxu0
    %v917 = vpop.f32.mrb[0].mxu0
    %v918 = vadd.f32 %v773, %v917
    %v919 = vpop.f32.mrb[0].mxu0
    %920 = vmatprep.mubr.bf16.mxu0 0
    %921 = vmatmul.mubr.bf16.gmra.mrb[0].mxu0 %v627
    %v922 = vpop.f32.mrb[0].mxu0
    %v923 = vadd.f32 %v778, %v922
    %v924 = vpop.f32.mrb[0].mxu0
    %v925 = vpop.f32.mrb[0].mxu0
    %v926 = vadd.f32 %v781, %v925
    %v927 = vpop.f32.mrb[0].mxu0
    %928 = vmatprep.mubr.bf16.mxu0 0
    %929 = vmatmul.mubr.bf16.gmra.mrb[0].mxu0 %v628
    %v930 = vpop.f32.mrb[0].mxu0
    %v931 = vadd.f32 %v786, %v930
    %v932 = vpop.f32.mrb[0].mxu0
    %v933 = vpop.f32.mrb[0].mxu0
    %v934 = vadd.f32 %v789, %v933
    %v935 = vpop.f32.mrb[0].mxu0
    %936 = vmatprep.mubr.bf16.mxu0 0
    %937 = vmatmul.mubr.bf16.gmra.mrb[0].mxu0 %v629
    %v938 = vpop.f32.mrb[0].mxu0
    %v939 = vadd.f32 %v794, %v938
    %v940 = vpop.f32.mrb[0].mxu0
    %v941 = vpop.f32.mrb[0].mxu0
    %v942 = vadd.f32 %v797, %v941
    %v943 = vpop.f32.mrb[0].mxu0
    %944 = vmatprep.mubr.bf16.mxu0 0
    %945 = vmatmul.mubr.bf16.gmra.mrb[0].mxu0 %v630
    %v946 = vpop.f32.mrb[0].mxu0
    %v947 = vadd.f32 %v802, %v946
    %v948 = vpop.f32.mrb[0].mxu0
    %v949 = vpop.f32.mrb[0].mxu0
    %v950 = vadd.f32 %v805, %v949
    %v951 = vpop.f32.mrb[0].mxu0
    %952 = vdwg.mxu0
    %v953 = vmax.f32 %v891, 0.0
    %v954 = vmax.f32 %v894, 0.0
    %v955 = vmax.f32 %v899, 0.0
    %v956 = vmax.f32 %v902, 0.0
    %v957 = vmax.f32 %v907, 0.0
    %v958 = vmax.f32 %v910, 0.0
    %v959 = vmax.f32 %v915, 0.0
    %v960 = vmax.f32 %v918, 0.0
    %v961 = vmax.f32 %v923, 0.0
    %v962 = vmax.f32 %v926, 0.0
    %v963 = vmax.f32 %v931, 0.0
    %v964 = vmax.f32 %v934, 0.0
    %v965 = vmax.f32 %v939, 0.0
    %v966 = vmax.f32 %v942, 0.0
    %v967 = vmax.f32 %v947, 0.0
    %v968 = vmax.f32 %v950, 0.0
    %v969 = vpack.c.bf16 %v954, %v953
    %v970 = vpack.c.bf16 %v956, %v955
    %v971 = vpack.c.bf16 %v958, %v957
    %v972 = vpack.c.bf16 %v960, %v959
    %v973 = vpack.c.bf16 %v962, %v961
    %v974 = vpack.c.bf16 %v964, %v963
    %v975 = vpack.c.bf16 %v966, %v965
    %v976 = vpack.c.bf16 %v968, %v967
    %977 = vmatprep.subr.bf16.mxu0 0
    %978 = vmatpush1.bf16.msra.mxu0 %v969
    %979 = vmatprep.subr.bf16.mxu0 0
    %980 = vmatpush1.bf16.msra.mxu0 %v970
    %981 = vmatprep.subr.bf16.mxu0 0
    %982 = vmatpush1.bf16.msra.mxu0 %v971
    %983 = vmatprep.subr.bf16.mxu0 0
    %984 = vmatpush1.bf16.msra.mxu0 %v972
    %985 = vmatprep.subr.bf16.mxu0 0
    %986 = vmatpush1.bf16.msra.mxu0 %v973
    %987 = vmatprep.subr.bf16.mxu0 0
    %988 = vmatpush1.bf16.msra.mxu0 %v974
    %989 = vmatprep.subr.bf16.mxu0 0
    %990 = vmatpush1.bf16.msra.mxu0 %v975
    %991 = vmatprep.subr.bf16.mxu0 0
    %992 = vmatpush1.bf16.msra.mxu0 %v976
    %993 = vmatprep.subr.bf16.mxu0 0
    %994 = vmatpush1.bf16.msra.mxu0 0
    %995 = vmatprep.subr.bf16.mxu0 0
    %996 = vmatpush1.bf16.msra.mxu0 0
    %997 = vmatprep.subr.bf16.mxu0 0
    %998 = vmatpush1.bf16.msra.mxu0 0
    %999 = vmatprep.subr.bf16.mxu0 0
    %1000 = vmatpush1.bf16.msra.mxu0 0
    %1001 = vmatprep.subr.bf16.mxu0 0
    %1002 = vmatpush1.bf16.msra.mxu0 0
    %1003 = vmatprep.subr.bf16.mxu0 0
    %1004 = vmatpush1.bf16.msra.mxu0 0
    %1005 = vmatprep.subr.bf16.mxu0 0
    %1006 = vmatpush1.bf16.msra.mxu0 0
    %1007 = vmatprep.subr.bf16.mxu0 0
    %1008 = vmatpush1.bf16.msra.mxu0 0
    %1009 = vmatprep.mubr.bf16.mxu0 0
    %1010 = vmatmul.mubr.bf16.gmra.mrb[0].mxu0 %v510
    %v1011 = vpop.f32.mrb[0].mxu0
    %v1012 = vadd.f32 0.0, %v1011
    %v1013 = vpop.f32.mrb[0].mxu0
    %v1014 = vpop.f32.mrb[0].mxu0
    %v1015 = vadd.f32 0.0, %v1014
    %v1016 = vpop.f32.mrb[0].mxu0
    %1017 = vmatprep.mubr.bf16.mxu0 0
    %1018 = vmatmul.mubr.bf16.gmra.mrb[0].mxu0 %v511
    %v1019 = vpop.f32.mrb[0].mxu0
    %v1020 = vadd.f32 0.0, %v1019
    %v1021 = vpop.f32.mrb[0].mxu0
    %v1022 = vpop.f32.mrb[0].mxu0
    %v1023 = vadd.f32 0.0, %v1022
    %v1024 = vpop.f32.mrb[0].mxu0
    %1025 = vmatprep.mubr.bf16.mxu0 0
    %1026 = vmatmul.mubr.bf16.gmra.mrb[0].mxu0 %v512
    %v1027 = vpop.f32.mrb[0].mxu0
    %v1028 = vadd.f32 0.0, %v1027
    %v1029 = vpop.f32.mrb[0].mxu0
    %v1030 = vpop.f32.mrb[0].mxu0
    %v1031 = vadd.f32 0.0, %v1030
    %v1032 = vpop.f32.mrb[0].mxu0
    %1033 = vmatprep.mubr.bf16.mxu0 0
    %1034 = vmatmul.mubr.bf16.gmra.mrb[0].mxu0 %v513
    %v1035 = vpop.f32.mrb[0].mxu0
    %v1036 = vadd.f32 0.0, %v1035
    %v1037 = vpop.f32.mrb[0].mxu0
    %v1038 = vpop.f32.mrb[0].mxu0
    %v1039 = vadd.f32 0.0, %v1038
    %v1040 = vpop.f32.mrb[0].mxu0
    %1041 = vmatprep.mubr.bf16.mxu0 0
    %1042 = vmatmul.mubr.bf16.gmra.mrb[0].mxu0 %v514
    %v1043 = vpop.f32.mrb[0].mxu0
    %v1044 = vadd.f32 0.0, %v1043
    %v1045 = vpop.f32.mrb[0].mxu0
    %v1046 = vpop.f32.mrb[0].mxu0
    %v1047 = vadd.f32 0.0, %v1046
    %v1048 = vpop.f32.mrb[0].mxu0
    %1049 = vmatprep.mubr.bf16.mxu0 0
    %1050 = vmatmul.mubr.bf16.gmra.mrb[0].mxu0 %v515
    %v1051 = vpop.f32.mrb[0].mxu0
    %v1052 = vadd.f32 0.0, %v1051
    %v1053 = vpop.f32.mrb[0].mxu0
    %v1054 = vpop.f32.mrb[0].mxu0
    %v1055 = vadd.f32 0.0, %v1054
    %v1056 = vpop.f32.mrb[0].mxu0
    %1057 = vmatprep.mubr.bf16.mxu0 0
    %1058 = vmatmul.mubr.bf16.gmra.mrb[0].mxu0 %v516
    %v1059 = vpop.f32.mrb[0].mxu0
    %v1060 = vadd.f32 0.0, %v1059
    %v1061 = vpop.f32.mrb[0].mxu0
    %v1062 = vpop.f32.mrb[0].mxu0
    %v1063 = vadd.f32 0.0, %v1062
    %v1064 = vpop.f32.mrb[0].mxu0
    %1065 = vmatprep.mubr.bf16.mxu0 0
    %1066 = vmatmul.mubr.bf16.gmra.mrb[0].mxu0 %v517
    %v1067 = vpop.f32.mrb[0].mxu0
    %v1068 = vadd.f32 0.0, %v1067
    %v1069 = vpop.f32.mrb[0].mxu0
    %v1070 = vpop.f32.mrb[0].mxu0
    %v1071 = vadd.f32 0.0, %v1070
    %v1072 = vpop.f32.mrb[0].mxu0
    %1073 = vdwg.mxu0
    %v1074 = vpack.c.bf16 %v1015, %v1012
    %v1075 = vpack.c.bf16 %v1023, %v1020
    %v1076 = vpack.c.bf16 %v1031, %v1028
    %v1077 = vpack.c.bf16 %v1039, %v1036
    %v1078 = vpack.c.bf16 %v1047, %v1044
    %v1079 = vpack.c.bf16 %v1055, %v1052
    %v1080 = vpack.c.bf16 %v1063, %v1060
    %v1081 = vpack.c.bf16 %v1071, %v1068
    %s1082 = scalar_lea.vmem [#allocation8], 128
    %v1083 = vld [vmem:[%s1082] sm:$0xf]
    %v1084 = vld [vmem:[%s1082 + $0x4] sm:$0xf]
    %v1085 = vld [vmem:[%s1082 + $0x8] sm:$0xf]
    %v1086 = vld [vmem:[%s1082 + $0xc] sm:$0xf]
    %v1087 = vld [vmem:[%s1082 + $0x10] sm:$0xf]
    %v1088 = vld [vmem:[%s1082 + $0x14] sm:$0xf]
    %v1089 = vld [vmem:[%s1082 + $0x18] sm:$0xf]
    %v1090 = vld [vmem:[%s1082 + $0x1c] sm:$0xf]
    %v1091 = vld [vmem:[%s1082 + $0x20] sm:$0xf]
    %v1092 = vld [vmem:[%s1082 + $0x24] sm:$0xf]
    %v1093 = vld [vmem:[%s1082 + $0x28] sm:$0xf]
    %v1094 = vld [vmem:[%s1082 + $0x2c] sm:$0xf]
    %v1095 = vld [vmem:[%s1082 + $0x30] sm:$0xf]
    %v1096 = vld [vmem:[%s1082 + $0x34] sm:$0xf]
    %v1097 = vld [vmem:[%s1082 + $0x38] sm:$0xf]
    %v1098 = vld [vmem:[%s1082 + $0x3c] sm:$0xf]
    %v1099 = vld [vmem:[%s1082 + $0x40] sm:$0xf]
    %v1100 = vld [vmem:[%s1082 + $0x44] sm:$0xf]
    %v1101 = vld [vmem:[%s1082 + $0x48] sm:$0xf]
    %v1102 = vld [vmem:[%s1082 + $0x4c] sm:$0xf]
    %v1103 = vld [vmem:[%s1082 + $0x50] sm:$0xf]
    %v1104 = vld [vmem:[%s1082 + $0x54] sm:$0xf]
    %v1105 = vld [vmem:[%s1082 + $0x58] sm:$0xf]
    %v1106 = vld [vmem:[%s1082 + $0x5c] sm:$0xf]
    %v1107 = vld [vmem:[%s1082 + $0x60] sm:$0xf]
    %v1108 = vld [vmem:[%s1082 + $0x64] sm:$0xf]
    %v1109 = vld [vmem:[%s1082 + $0x68] sm:$0xf]
    %v1110 = vld [vmem:[%s1082 + $0x6c] sm:$0xf]
    %v1111 = vld [vmem:[%s1082 + $0x70] sm:$0xf]
    %v1112 = vld [vmem:[%s1082 + $0x74] sm:$0xf]
    %v1113 = vld [vmem:[%s1082 + $0x78] sm:$0xf]
    %v1114 = vld [vmem:[%s1082 + $0x7c] sm:$0xf]
    %v1131 = vunpack.c.l.b16 %v1099
    %v1132 = vunpack.c.l.b16 %v1100
    %v1133 = vunpack.c.l.b16 %v1101
    %v1134 = vunpack.c.l.b16 %v1102
    %v1135 = vunpack.c.l.b16 %v1103
    %v1136 = vunpack.c.l.b16 %v1104
    %v1137 = vunpack.c.l.b16 %v1105
    %v1138 = vunpack.c.l.b16 %v1106
    %v1139 = vunpack.c.l.b16 %v1107
    %v1140 = vunpack.c.l.b16 %v1108
    %v1141 = vunpack.c.l.b16 %v1109
    %v1142 = vunpack.c.l.b16 %v1110
    %v1143 = vunpack.c.l.b16 %v1111
    %v1144 = vunpack.c.l.b16 %v1112
    %v1145 = vunpack.c.l.b16 %v1113
    %v1146 = vunpack.c.l.b16 %v1114
    %v1147 = vpack.c.b16 %v1132, %v1131
    %v1148 = vpack.c.b16 %v1134, %v1133
    %v1149 = vpack.c.b16 %v1136, %v1135
    %v1150 = vpack.c.b16 %v1138, %v1137
    %v1151 = vpack.c.b16 %v1140, %v1139
    %v1152 = vpack.c.b16 %v1142, %v1141
    %v1153 = vpack.c.b16 %v1144, %v1143
    %v1154 = vpack.c.b16 %v1146, %v1145
    %1163 = vmatprep.subr.bf16.mxu0 0
    %1164 = vmatpush1.bf16.msra.mxu0 %v1147
    %1165 = vmatprep.subr.bf16.mxu0 0
    %1166 = vmatpush1.bf16.msra.mxu0 %v1148
    %1167 = vmatprep.subr.bf16.mxu0 0
    %1168 = vmatpush1.bf16.msra.mxu0 %v1149
    %1169 = vmatprep.subr.bf16.mxu0 0
    %1170 = vmatpush1.bf16.msra.mxu0 %v1150
    %1171 = vmatprep.subr.bf16.mxu0 0
    %1172 = vmatpush1.bf16.msra.mxu0 %v1151
    %1173 = vmatprep.subr.bf16.mxu0 0
    %1174 = vmatpush1.bf16.msra.mxu0 %v1152
    %1175 = vmatprep.subr.bf16.mxu0 0
    %1176 = vmatpush1.bf16.msra.mxu0 %v1153
    %1177 = vmatprep.subr.bf16.mxu0 0
    %1178 = vmatpush1.bf16.msra.mxu0 %v1154
    %1179 = vmatprep.subr.bf16.mxu0 0
    %1180 = vmatpush1.bf16.msra.mxu0 0
    %1181 = vmatprep.subr.bf16.mxu0 0
    %1182 = vmatpush1.bf16.msra.mxu0 0
    %1183 = vmatprep.subr.bf16.mxu0 0
    %1184 = vmatpush1.bf16.msra.mxu0 0
    %1185 = vmatprep.subr.bf16.mxu0 0
    %1186 = vmatpush1.bf16.msra.mxu0 0
    %1187 = vmatprep.subr.bf16.mxu0 0
    %1188 = vmatpush1.bf16.msra.mxu0 0
    %1189 = vmatprep.subr.bf16.mxu0 0
    %1190 = vmatpush1.bf16.msra.mxu0 0
    %1191 = vmatprep.subr.bf16.mxu0 0
    %1192 = vmatpush1.bf16.msra.mxu0 0
    %1193 = vmatprep.subr.bf16.mxu0 0
    %1194 = vmatpush1.bf16.msra.mxu0 0
    %1195 = vmatprep.mubr.bf16.mxu0 0
    %1196 = vmatmul.mubr.bf16.gmra.mrb[0].mxu0 %v454
    %v1197 = vpop.f32.mrb[0].mxu0
    %v1198 = vadd.f32 0.0, %v1197
    %v1199 = vpop.f32.mrb[0].mxu0
    %v1200 = vpop.f32.mrb[0].mxu0
    %v1201 = vadd.f32 0.0, %v1200
    %v1202 = vpop.f32.mrb[0].mxu0
    %1203 = vmatprep.mubr.bf16.mxu0 0
    %1204 = vmatmul.mubr.bf16.gmra.mrb[0].mxu0 %v455
    %v1205 = vpop.f32.mrb[0].mxu0
    %v1206 = vadd.f32 0.0, %v1205
    %v1207 = vpop.f32.mrb[0].mxu0
    %v1208 = vpop.f32.mrb[0].mxu0
    %v1209 = vadd.f32 0.0, %v1208
    %v1210 = vpop.f32.mrb[0].mxu0
    %1211 = vmatprep.mubr.bf16.mxu0 0
    %1212 = vmatmul.mubr.bf16.gmra.mrb[0].mxu0 %v456
    %v1213 = vpop.f32.mrb[0].mxu0
    %v1214 = vadd.f32 0.0, %v1213
    %v1215 = vpop.f32.mrb[0].mxu0
    %v1216 = vpop.f32.mrb[0].mxu0
    %v1217 = vadd.f32 0.0, %v1216
    %v1218 = vpop.f32.mrb[0].mxu0
    %1219 = vmatprep.mubr.bf16.mxu0 0
    %1220 = vmatmul.mubr.bf16.gmra.mrb[0].mxu0 %v457
    %v1221 = vpop.f32.mrb[0].mxu0
    %v1222 = vadd.f32 0.0, %v1221
    %v1223 = vpop.f32.mrb[0].mxu0
    %v1224 = vpop.f32.mrb[0].mxu0
    %v1225 = vadd.f32 0.0, %v1224
    %v1226 = vpop.f32.mrb[0].mxu0
    %1227 = vmatprep.mubr.bf16.mxu0 0
    %1228 = vmatmul.mubr.bf16.gmra.mrb[0].mxu0 %v458
    %v1229 = vpop.f32.mrb[0].mxu0
    %v1230 = vadd.f32 0.0, %v1229
    %v1231 = vpop.f32.mrb[0].mxu0
    %v1232 = vpop.f32.mrb[0].mxu0
    %v1233 = vadd.f32 0.0, %v1232
    %v1234 = vpop.f32.mrb[0].mxu0
    %1235 = vmatprep.mubr.bf16.mxu0 0
    %1236 = vmatmul.mubr.bf16.gmra.mrb[0].mxu0 %v459
    %v1237 = vpop.f32.mrb[0].mxu0
    %v1238 = vadd.f32 0.0, %v1237
    %v1239 = vpop.f32.mrb[0].mxu0
    %v1240 = vpop.f32.mrb[0].mxu0
    %v1241 = vadd.f32 0.0, %v1240
    %v1242 = vpop.f32.mrb[0].mxu0
    %1243 = vmatprep.mubr.bf16.mxu0 0
    %1244 = vmatmul.mubr.bf16.gmra.mrb[0].mxu0 %v460
    %v1245 = vpop.f32.mrb[0].mxu0
    %v1246 = vadd.f32 0.0, %v1245
    %v1247 = vpop.f32.mrb[0].mxu0
    %v1248 = vpop.f32.mrb[0].mxu0
    %v1249 = vadd.f32 0.0, %v1248
    %v1250 = vpop.f32.mrb[0].mxu0
    %1251 = vmatprep.mubr.bf16.mxu0 0
    %1252 = vmatmul.mubr.bf16.gmra.mrb[0].mxu0 %v461
    %v1253 = vpop.f32.mrb[0].mxu0
    %v1254 = vadd.f32 0.0, %v1253
    %v1255 = vpop.f32.mrb[0].mxu0
    %v1256 = vpop.f32.mrb[0].mxu0
    %v1257 = vadd.f32 0.0, %v1256
    %v1258 = vpop.f32.mrb[0].mxu0
    %1259 = vdwg.mxu0
    %v1276 = vunpack.c.l.b16 %v1083
    %v1277 = vunpack.c.l.b16 %v1084
    %v1278 = vunpack.c.l.b16 %v1085
    %v1279 = vunpack.c.l.b16 %v1086
    %v1280 = vunpack.c.l.b16 %v1087
    %v1281 = vunpack.c.l.b16 %v1088
    %v1282 = vunpack.c.l.b16 %v1089
    %v1283 = vunpack.c.l.b16 %v1090
    %v1284 = vunpack.c.l.b16 %v1091
    %v1285 = vunpack.c.l.b16 %v1092
    %v1286 = vunpack.c.l.b16 %v1093
    %v1287 = vunpack.c.l.b16 %v1094
    %v1288 = vunpack.c.l.b16 %v1095
    %v1289 = vunpack.c.l.b16 %v1096
    %v1290 = vunpack.c.l.b16 %v1097
    %v1291 = vunpack.c.l.b16 %v1098
    %v1292 = vpack.c.b16 %v1277, %v1276
    %v1293 = vpack.c.b16 %v1279, %v1278
    %v1294 = vpack.c.b16 %v1281, %v1280
    %v1295 = vpack.c.b16 %v1283, %v1282
    %v1296 = vpack.c.b16 %v1285, %v1284
    %v1297 = vpack.c.b16 %v1287, %v1286
    %v1298 = vpack.c.b16 %v1289, %v1288
    %v1299 = vpack.c.b16 %v1291, %v1290
    %1308 = vmatprep.subr.bf16.mxu0 0
    %1309 = vmatpush1.bf16.msra.mxu0 %v1292
    %1310 = vmatprep.subr.bf16.mxu0 0
    %1311 = vmatpush1.bf16.msra.mxu0 %v1293
    %1312 = vmatprep.subr.bf16.mxu0 0
    %1313 = vmatpush1.bf16.msra.mxu0 %v1294
    %1314 = vmatprep.subr.bf16.mxu0 0
    %1315 = vmatpush1.bf16.msra.mxu0 %v1295
    %1316 = vmatprep.subr.bf16.mxu0 0
    %1317 = vmatpush1.bf16.msra.mxu0 %v1296
    %1318 = vmatprep.subr.bf16.mxu0 0
    %1319 = vmatpush1.bf16.msra.mxu0 %v1297
    %1320 = vmatprep.subr.bf16.mxu0 0
    %1321 = vmatpush1.bf16.msra.mxu0 %v1298
    %1322 = vmatprep.subr.bf16.mxu0 0
    %1323 = vmatpush1.bf16.msra.mxu0 %v1299
    %1324 = vmatprep.subr.bf16.mxu0 0
    %1325 = vmatpush1.bf16.msra.mxu0 0
    %1326 = vmatprep.subr.bf16.mxu0 0
    %1327 = vmatpush1.bf16.msra.mxu0 0
    %1328 = vmatprep.subr.bf16.mxu0 0
    %1329 = vmatpush1.bf16.msra.mxu0 0
    %1330 = vmatprep.subr.bf16.mxu0 0
    %1331 = vmatpush1.bf16.msra.mxu0 0
    %1332 = vmatprep.subr.bf16.mxu0 0
    %1333 = vmatpush1.bf16.msra.mxu0 0
    %1334 = vmatprep.subr.bf16.mxu0 0
    %1335 = vmatpush1.bf16.msra.mxu0 0
    %1336 = vmatprep.subr.bf16.mxu0 0
    %1337 = vmatpush1.bf16.msra.mxu0 0
    %1338 = vmatprep.subr.bf16.mxu0 0
    %1339 = vmatpush1.bf16.msra.mxu0 0
    %1340 = vmatprep.mubr.bf16.mxu0 0
    %1341 = vmatmul.mubr.bf16.gmra.mrb[0].mxu0 %v1074
    %v1342 = vpop.f32.mrb[0].mxu0
    %v1343 = vadd.f32 %v1198, %v1342
    %v1344 = vpop.f32.mrb[0].mxu0
    %v1345 = vpop.f32.mrb[0].mxu0
    %v1346 = vadd.f32 %v1201, %v1345
    %v1347 = vpop.f32.mrb[0].mxu0
    %1348 = vmatprep.mubr.bf16.mxu0 0
    %1349 = vmatmul.mubr.bf16.gmra.mrb[0].mxu0 %v1075
    %v1350 = vpop.f32.mrb[0].mxu0
    %v1351 = vadd.f32 %v1206, %v1350
    %v1352 = vpop.f32.mrb[0].mxu0
    %v1353 = vpop.f32.mrb[0].mxu0
    %v1354 = vadd.f32 %v1209, %v1353
    %v1355 = vpop.f32.mrb[0].mxu0
    %1356 = vmatprep.mubr.bf16.mxu0 0
    %1357 = vmatmul.mubr.bf16.gmra.mrb[0].mxu0 %v1076
    %v1358 = vpop.f32.mrb[0].mxu0
    %v1359 = vadd.f32 %v1214, %v1358
    %v1360 = vpop.f32.mrb[0].mxu0
    %v1361 = vpop.f32.mrb[0].mxu0
    %v1362 = vadd.f32 %v1217, %v1361
    %v1363 = vpop.f32.mrb[0].mxu0
    %1364 = vmatprep.mubr.bf16.mxu0 0
    %1365 = vmatmul.mubr.bf16.gmra.mrb[0].mxu0 %v1077
    %v1366 = vpop.f32.mrb[0].mxu0
    %v1367 = vadd.f32 %v1222, %v1366
    %v1368 = vpop.f32.mrb[0].mxu0
    %v1369 = vpop.f32.mrb[0].mxu0
    %v1370 = vadd.f32 %v1225, %v1369
    %v1371 = vpop.f32.mrb[0].mxu0
    %1372 = vmatprep.mubr.bf16.mxu0 0
    %1373 = vmatmul.mubr.bf16.gmra.mrb[0].mxu0 %v1078
    %v1374 = vpop.f32.mrb[0].mxu0
    %v1375 = vadd.f32 %v1230, %v1374
    %v1376 = vpop.f32.mrb[0].mxu0
    %v1377 = vpop.f32.mrb[0].mxu0
    %v1378 = vadd.f32 %v1233, %v1377
    %v1379 = vpop.f32.mrb[0].mxu0
    %1380 = vmatprep.mubr.bf16.mxu0 0
    %1381 = vmatmul.mubr.bf16.gmra.mrb[0].mxu0 %v1079
    %v1382 = vpop.f32.mrb[0].mxu0
    %v1383 = vadd.f32 %v1238, %v1382
    %v1384 = vpop.f32.mrb[0].mxu0
    %v1385 = vpop.f32.mrb[0].mxu0
    %v1386 = vadd.f32 %v1241, %v1385
    %v1387 = vpop.f32.mrb[0].mxu0
    %1388 = vmatprep.mubr.bf16.mxu0 0
    %1389 = vmatmul.mubr.bf16.gmra.mrb[0].mxu0 %v1080
    %v1390 = vpop.f32.mrb[0].mxu0
    %v1391 = vadd.f32 %v1246, %v1390
    %v1392 = vpop.f32.mrb[0].mxu0
    %v1393 = vpop.f32.mrb[0].mxu0
    %v1394 = vadd.f32 %v1249, %v1393
    %v1395 = vpop.f32.mrb[0].mxu0
    %1396 = vmatprep.mubr.bf16.mxu0 0
    %1397 = vmatmul.mubr.bf16.gmra.mrb[0].mxu0 %v1081
    %v1398 = vpop.f32.mrb[0].mxu0
    %v1399 = vadd.f32 %v1254, %v1398
    %v1400 = vpop.f32.mrb[0].mxu0
    %v1401 = vpop.f32.mrb[0].mxu0
    %v1402 = vadd.f32 %v1257, %v1401
    %v1403 = vpop.f32.mrb[0].mxu0
    %1404 = vdwg.mxu0
    %v1405 = vmax.f32 %v1343, 0.0
    %v1406 = vmax.f32 %v1346, 0.0
    %v1407 = vmax.f32 %v1351, 0.0
    %v1408 = vmax.f32 %v1354, 0.0
    %v1409 = vmax.f32 %v1359, 0.0
    %v1410 = vmax.f32 %v1362, 0.0
    %v1411 = vmax.f32 %v1367, 0.0
    %v1412 = vmax.f32 %v1370, 0.0
    %v1413 = vmax.f32 %v1375, 0.0
    %v1414 = vmax.f32 %v1378, 0.0
    %v1415 = vmax.f32 %v1383, 0.0
    %v1416 = vmax.f32 %v1386, 0.0
    %v1417 = vmax.f32 %v1391, 0.0
    %v1418 = vmax.f32 %v1394, 0.0
    %v1419 = vmax.f32 %v1399, 0.0
    %v1420 = vmax.f32 %v1402, 0.0
    %v1421 = vpack.c.bf16 %v1406, %v1405
    %v1422 = vpack.c.bf16 %v1408, %v1407
    %v1423 = vpack.c.bf16 %v1410, %v1409
    %v1424 = vpack.c.bf16 %v1412, %v1411
    %v1425 = vpack.c.bf16 %v1414, %v1413
    %v1426 = vpack.c.bf16 %v1416, %v1415
    %v1427 = vpack.c.bf16 %v1418, %v1417
    %v1428 = vpack.c.bf16 %v1420, %v1419
    %1429 = vmatprep.subr.bf16.mxu0 0
    %1430 = vmatpush1.bf16.msra.mxu0 %v1421
    %1431 = vmatprep.subr.bf16.mxu0 0
    %1432 = vmatpush1.bf16.msra.mxu0 %v1422
    %1433 = vmatprep.subr.bf16.mxu0 0
    %1434 = vmatpush1.bf16.msra.mxu0 %v1423
    %1435 = vmatprep.subr.bf16.mxu0 0
    %1436 = vmatpush1.bf16.msra.mxu0 %v1424
    %1437 = vmatprep.subr.bf16.mxu0 0
    %1438 = vmatpush1.bf16.msra.mxu0 %v1425
    %1439 = vmatprep.subr.bf16.mxu0 0
    %1440 = vmatpush1.bf16.msra.mxu0 %v1426
    %1441 = vmatprep.subr.bf16.mxu0 0
    %1442 = vmatpush1.bf16.msra.mxu0 %v1427
    %1443 = vmatprep.subr.bf16.mxu0 0
    %1444 = vmatpush1.bf16.msra.mxu0 %v1428
    %1445 = vmatprep.subr.bf16.mxu0 0
    %1446 = vmatpush1.bf16.msra.mxu0 0
    %1447 = vmatprep.subr.bf16.mxu0 0
    %1448 = vmatpush1.bf16.msra.mxu0 0
    %1449 = vmatprep.subr.bf16.mxu0 0
    %1450 = vmatpush1.bf16.msra.mxu0 0
    %1451 = vmatprep.subr.bf16.mxu0 0
    %1452 = vmatpush1.bf16.msra.mxu0 0
    %1453 = vmatprep.subr.bf16.mxu0 0
    %1454 = vmatpush1.bf16.msra.mxu0 0
    %1455 = vmatprep.subr.bf16.mxu0 0
    %1456 = vmatpush1.bf16.msra.mxu0 0
    %1457 = vmatprep.subr.bf16.mxu0 0
    %1458 = vmatpush1.bf16.msra.mxu0 0
    %1459 = vmatprep.subr.bf16.mxu0 0
    %1460 = vmatpush1.bf16.msra.mxu0 0
    %1461 = vmatprep.mubr.bf16.mxu0 0
    %1462 = vmatmul.mubr.bf16.gmra.mrb[0].mxu0 %v510
    %v1463 = vpop.f32.mrb[0].mxu0
    %v1464 = vadd.f32 0.0, %v1463
    %v1465 = vpop.f32.mrb[0].mxu0
    %v1466 = vpop.f32.mrb[0].mxu0
    %v1467 = vadd.f32 0.0, %v1466
    %v1468 = vpop.f32.mrb[0].mxu0
    %1469 = vmatprep.mubr.bf16.mxu0 0
    %1470 = vmatmul.mubr.bf16.gmra.mrb[0].mxu0 %v511
    %v1471 = vpop.f32.mrb[0].mxu0
    %v1472 = vadd.f32 0.0, %v1471
    %v1473 = vpop.f32.mrb[0].mxu0
    %v1474 = vpop.f32.mrb[0].mxu0
    %v1475 = vadd.f32 0.0, %v1474
    %v1476 = vpop.f32.mrb[0].mxu0
    %1477 = vmatprep.mubr.bf16.mxu0 0
    %1478 = vmatmul.mubr.bf16.gmra.mrb[0].mxu0 %v512
    %v1479 = vpop.f32.mrb[0].mxu0
    %v1480 = vadd.f32 0.0, %v1479
    %v1481 = vpop.f32.mrb[0].mxu0
    %v1482 = vpop.f32.mrb[0].mxu0
    %v1483 = vadd.f32 0.0, %v1482
    %v1484 = vpop.f32.mrb[0].mxu0
    %1485 = vmatprep.mubr.bf16.mxu0 0
    %1486 = vmatmul.mubr.bf16.gmra.mrb[0].mxu0 %v513
    %v1487 = vpop.f32.mrb[0].mxu0
    %v1488 = vadd.f32 0.0, %v1487
    %v1489 = vpop.f32.mrb[0].mxu0
    %v1490 = vpop.f32.mrb[0].mxu0
    %v1491 = vadd.f32 0.0, %v1490
    %v1492 = vpop.f32.mrb[0].mxu0
    %1493 = vmatprep.mubr.bf16.mxu0 0
    %1494 = vmatmul.mubr.bf16.gmra.mrb[0].mxu0 %v514
    %v1495 = vpop.f32.mrb[0].mxu0
    %v1496 = vadd.f32 0.0, %v1495
    %v1497 = vpop.f32.mrb[0].mxu0
    %v1498 = vpop.f32.mrb[0].mxu0
    %v1499 = vadd.f32 0.0, %v1498
    %v1500 = vpop.f32.mrb[0].mxu0
    %1501 = vmatprep.mubr.bf16.mxu0 0
    %1502 = vmatmul.mubr.bf16.gmra.mrb[0].mxu0 %v515
    %v1503 = vpop.f32.mrb[0].mxu0
    %v1504 = vadd.f32 0.0, %v1503
    %v1505 = vpop.f32.mrb[0].mxu0
    %v1506 = vpop.f32.mrb[0].mxu0
    %v1507 = vadd.f32 0.0, %v1506
    %v1508 = vpop.f32.mrb[0].mxu0
    %1509 = vmatprep.mubr.bf16.mxu0 0
    %1510 = vmatmul.mubr.bf16.gmra.mrb[0].mxu0 %v516
    %v1511 = vpop.f32.mrb[0].mxu0
    %v1512 = vadd.f32 0.0, %v1511
    %v1513 = vpop.f32.mrb[0].mxu0
    %v1514 = vpop.f32.mrb[0].mxu0
    %v1515 = vadd.f32 0.0, %v1514
    %v1516 = vpop.f32.mrb[0].mxu0
    %1517 = vmatprep.mubr.bf16.mxu0 0
    %1518 = vmatmul.mubr.bf16.gmra.mrb[0].mxu0 %v517
    %v1519 = vpop.f32.mrb[0].mxu0
    %v1520 = vadd.f32 0.0, %v1519
    %v1521 = vpop.f32.mrb[0].mxu0
    %v1522 = vpop.f32.mrb[0].mxu0
    %v1523 = vadd.f32 0.0, %v1522
    %v1524 = vpop.f32.mrb[0].mxu0
    %1525 = vdwg.mxu0
    %v1526 = vpack.c.bf16 %v1467, %v1464
    %v1527 = vpack.c.bf16 %v1475, %v1472
    %v1528 = vpack.c.bf16 %v1483, %v1480
    %v1529 = vpack.c.bf16 %v1491, %v1488
    %v1530 = vpack.c.bf16 %v1499, %v1496
    %v1531 = vpack.c.bf16 %v1507, %v1504
    %v1532 = vpack.c.bf16 %v1515, %v1512
    %v1533 = vpack.c.bf16 %v1523, %v1520
    %s1534 = scalar_lea.vmem [#allocation8], 256
    %v1535 = vld [vmem:[%s1534] sm:$0xf]
    %v1536 = vld [vmem:[%s1534 + $0x4] sm:$0xf]
    %v1537 = vld [vmem:[%s1534 + $0x8] sm:$0xf]
    %v1538 = vld [vmem:[%s1534 + $0xc] sm:$0xf]
    %v1539 = vld [vmem:[%s1534 + $0x10] sm:$0xf]
    %v1540 = vld [vmem:[%s1534 + $0x14] sm:$0xf]
    %v1541 = vld [vmem:[%s1534 + $0x18] sm:$0xf]
    %v1542 = vld [vmem:[%s1534 + $0x1c] sm:$0xf]
    %v1543 = vld [vmem:[%s1534 + $0x20] sm:$0xf]
    %v1544 = vld [vmem:[%s1534 + $0x24] sm:$0xf]
    %v1545 = vld [vmem:[%s1534 + $0x28] sm:$0xf]
    %v1546 = vld [vmem:[%s1534 + $0x2c] sm:$0xf]
    %v1547 = vld [vmem:[%s1534 + $0x30] sm:$0xf]
    %v1548 = vld [vmem:[%s1534 + $0x34] sm:$0xf]
    %v1549 = vld [vmem:[%s1534 + $0x38] sm:$0xf]
    %v1550 = vld [vmem:[%s1534 + $0x3c] sm:$0xf]
    %v1551 = vld [vmem:[%s1534 + $0x40] sm:$0xf]
    %v1552 = vld [vmem:[%s1534 + $0x44] sm:$0xf]
    %v1553 = vld [vmem:[%s1534 + $0x48] sm:$0xf]
    %v1554 = vld [vmem:[%s1534 + $0x4c] sm:$0xf]
    %v1555 = vld [vmem:[%s1534 + $0x50] sm:$0xf]
    %v1556 = vld [vmem:[%s1534 + $0x54] sm:$0xf]
    %v1557 = vld [vmem:[%s1534 + $0x58] sm:$0xf]
    %v1558 = vld [vmem:[%s1534 + $0x5c] sm:$0xf]
    %v1559 = vld [vmem:[%s1534 + $0x60] sm:$0xf]
    %v1560 = vld [vmem:[%s1534 + $0x64] sm:$0xf]
    %v1561 = vld [vmem:[%s1534 + $0x68] sm:$0xf]
    %v1562 = vld [vmem:[%s1534 + $0x6c] sm:$0xf]
    %v1563 = vld [vmem:[%s1534 + $0x70] sm:$0xf]
    %v1564 = vld [vmem:[%s1534 + $0x74] sm:$0xf]
    %v1565 = vld [vmem:[%s1534 + $0x78] sm:$0xf]
    %v1566 = vld [vmem:[%s1534 + $0x7c] sm:$0xf]
    %v1583 = vunpack.c.l.b16 %v1551
    %v1584 = vunpack.c.l.b16 %v1552
    %v1585 = vunpack.c.l.b16 %v1553
    %v1586 = vunpack.c.l.b16 %v1554
    %v1587 = vunpack.c.l.b16 %v1555
    %v1588 = vunpack.c.l.b16 %v1556
    %v1589 = vunpack.c.l.b16 %v1557
    %v1590 = vunpack.c.l.b16 %v1558
    %v1591 = vunpack.c.l.b16 %v1559
    %v1592 = vunpack.c.l.b16 %v1560
    %v1593 = vunpack.c.l.b16 %v1561
    %v1594 = vunpack.c.l.b16 %v1562
    %v1595 = vunpack.c.l.b16 %v1563
    %v1596 = vunpack.c.l.b16 %v1564
    %v1597 = vunpack.c.l.b16 %v1565
    %v1598 = vunpack.c.l.b16 %v1566
    %v1599 = vpack.c.b16 %v1584, %v1583
    %v1600 = vpack.c.b16 %v1586, %v1585
    %v1601 = vpack.c.b16 %v1588, %v1587
    %v1602 = vpack.c.b16 %v1590, %v1589
    %v1603 = vpack.c.b16 %v1592, %v1591
    %v1604 = vpack.c.b16 %v1594, %v1593
    %v1605 = vpack.c.b16 %v1596, %v1595
    %v1606 = vpack.c.b16 %v1598, %v1597
    %1615 = vmatprep.subr.bf16.mxu0 0
    %1616 = vmatpush1.bf16.msra.mxu0 %v1599
    %1617 = vmatprep.subr.bf16.mxu0 0
    %1618 = vmatpush1.bf16.msra.mxu0 %v1600
    %1619 = vmatprep.subr.bf16.mxu0 0
    %1620 = vmatpush1.bf16.msra.mxu0 %v1601
    %1621 = vmatprep.subr.bf16.mxu0 0
    %1622 = vmatpush1.bf16.msra.mxu0 %v1602
    %1623 = vmatprep.subr.bf16.mxu0 0
    %1624 = vmatpush1.bf16.msra.mxu0 %v1603
    %1625 = vmatprep.subr.bf16.mxu0 0
    %1626 = vmatpush1.bf16.msra.mxu0 %v1604
    %1627 = vmatprep.subr.bf16.mxu0 0
    %1628 = vmatpush1.bf16.msra.mxu0 %v1605
    %1629 = vmatprep.subr.bf16.mxu0 0
    %1630 = vmatpush1.bf16.msra.mxu0 %v1606
    %1631 = vmatprep.subr.bf16.mxu0 0
    %1632 = vmatpush1.bf16.msra.mxu0 0
    %1633 = vmatprep.subr.bf16.mxu0 0
    %1634 = vmatpush1.bf16.msra.mxu0 0
    %1635 = vmatprep.subr.bf16.mxu0 0
    %1636 = vmatpush1.bf16.msra.mxu0 0
    %1637 = vmatprep.subr.bf16.mxu0 0
    %1638 = vmatpush1.bf16.msra.mxu0 0
    %1639 = vmatprep.subr.bf16.mxu0 0
    %1640 = vmatpush1.bf16.msra.mxu0 0
    %1641 = vmatprep.subr.bf16.mxu0 0
    %1642 = vmatpush1.bf16.msra.mxu0 0
    %1643 = vmatprep.subr.bf16.mxu0 0
    %1644 = vmatpush1.bf16.msra.mxu0 0
    %1645 = vmatprep.subr.bf16.mxu0 0
    %1646 = vmatpush1.bf16.msra.mxu0 0
    %1647 = vmatprep.mubr.bf16.mxu0 0
    %1648 = vmatmul.mubr.bf16.gmra.mrb[0].mxu0 %v454
    %v1649 = vpop.f32.mrb[0].mxu0
    %v1650 = vadd.f32 0.0, %v1649
    %v1651 = vpop.f32.mrb[0].mxu0
    %v1652 = vpop.f32.mrb[0].mxu0
    %v1653 = vadd.f32 0.0, %v1652
    %v1654 = vpop.f32.mrb[0].mxu0
    %1655 = vmatprep.mubr.bf16.mxu0 0
    %1656 = vmatmul.mubr.bf16.gmra.mrb[0].mxu0 %v455
    %v1657 = vpop.f32.mrb[0].mxu0
    %v1658 = vadd.f32 0.0, %v1657
    %v1659 = vpop.f32.mrb[0].mxu0
    %v1660 = vpop.f32.mrb[0].mxu0
    %v1661 = vadd.f32 0.0, %v1660
    %v1662 = vpop.f32.mrb[0].mxu0
    %1663 = vmatprep.mubr.bf16.mxu0 0
    %1664 = vmatmul.mubr.bf16.gmra.mrb[0].mxu0 %v456
    %v1665 = vpop.f32.mrb[0].mxu0
    %v1666 = vadd.f32 0.0, %v1665
    %v1667 = vpop.f32.mrb[0].mxu0
    %v1668 = vpop.f32.mrb[0].mxu0
    %v1669 = vadd.f32 0.0, %v1668
    %v1670 = vpop.f32.mrb[0].mxu0
    %1671 = vmatprep.mubr.bf16.mxu0 0
    %1672 = vmatmul.mubr.bf16.gmra.mrb[0].mxu0 %v457
    %v1673 = vpop.f32.mrb[0].mxu0
    %v1674 = vadd.f32 0.0, %v1673
    %v1675 = vpop.f32.mrb[0].mxu0
    %v1676 = vpop.f32.mrb[0].mxu0
    %v1677 = vadd.f32 0.0, %v1676
    %v1678 = vpop.f32.mrb[0].mxu0
    %1679 = vmatprep.mubr.bf16.mxu0 0
    %1680 = vmatmul.mubr.bf16.gmra.mrb[0].mxu0 %v458
    %v1681 = vpop.f32.mrb[0].mxu0
    %v1682 = vadd.f32 0.0, %v1681
    %v1683 = vpop.f32.mrb[0].mxu0
    %v1684 = vpop.f32.mrb[0].mxu0
    %v1685 = vadd.f32 0.0, %v1684
    %v1686 = vpop.f32.mrb[0].mxu0
    %1687 = vmatprep.mubr.bf16.mxu0 0
    %1688 = vmatmul.mubr.bf16.gmra.mrb[0].mxu0 %v459
    %v1689 = vpop.f32.mrb[0].mxu0
    %v1690 = vadd.f32 0.0, %v1689
    %v1691 = vpop.f32.mrb[0].mxu0
    %v1692 = vpop.f32.mrb[0].mxu0
    %v1693 = vadd.f32 0.0, %v1692
    %v1694 = vpop.f32.mrb[0].mxu0
    %1695 = vmatprep.mubr.bf16.mxu0 0
    %1696 = vmatmul.mubr.bf16.gmra.mrb[0].mxu0 %v460
    %v1697 = vpop.f32.mrb[0].mxu0
    %v1698 = vadd.f32 0.0, %v1697
    %v1699 = vpop.f32.mrb[0].mxu0
    %v1700 = vpop.f32.mrb[0].mxu0
    %v1701 = vadd.f32 0.0, %v1700
    %v1702 = vpop.f32.mrb[0].mxu0
    %1703 = vmatprep.mubr.bf16.mxu0 0
    %1704 = vmatmul.mubr.bf16.gmra.mrb[0].mxu0 %v461
    %v1705 = vpop.f32.mrb[0].mxu0
    %v1706 = vadd.f32 0.0, %v1705
    %v1707 = vpop.f32.mrb[0].mxu0
    %v1708 = vpop.f32.mrb[0].mxu0
    %v1709 = vadd.f32 0.0, %v1708
    %v1710 = vpop.f32.mrb[0].mxu0
    %1711 = vdwg.mxu0
    %v1728 = vunpack.c.l.b16 %v1535
    %v1729 = vunpack.c.l.b16 %v1536
    %v1730 = vunpack.c.l.b16 %v1537
    %v1731 = vunpack.c.l.b16 %v1538
    %v1732 = vunpack.c.l.b16 %v1539
    %v1733 = vunpack.c.l.b16 %v1540
    %v1734 = vunpack.c.l.b16 %v1541
    %v1735 = vunpack.c.l.b16 %v1542
    %v1736 = vunpack.c.l.b16 %v1543
    %v1737 = vunpack.c.l.b16 %v1544
    %v1738 = vunpack.c.l.b16 %v1545
    %v1739 = vunpack.c.l.b16 %v1546
    %v1740 = vunpack.c.l.b16 %v1547
    %v1741 = vunpack.c.l.b16 %v1548
    %v1742 = vunpack.c.l.b16 %v1549
    %v1743 = vunpack.c.l.b16 %v1550
    %v1744 = vpack.c.b16 %v1729, %v1728
    %v1745 = vpack.c.b16 %v1731, %v1730
    %v1746 = vpack.c.b16 %v1733, %v1732
    %v1747 = vpack.c.b16 %v1735, %v1734
    %v1748 = vpack.c.b16 %v1737, %v1736
    %v1749 = vpack.c.b16 %v1739, %v1738
    %v1750 = vpack.c.b16 %v1741, %v1740
    %v1751 = vpack.c.b16 %v1743, %v1742
    %1760 = vmatprep.subr.bf16.mxu0 0
    %1761 = vmatpush1.bf16.msra.mxu0 %v1744
    %1762 = vmatprep.subr.bf16.mxu0 0
    %1763 = vmatpush1.bf16.msra.mxu0 %v1745
    %1764 = vmatprep.subr.bf16.mxu0 0
    %1765 = vmatpush1.bf16.msra.mxu0 %v1746
    %1766 = vmatprep.subr.bf16.mxu0 0
    %1767 = vmatpush1.bf16.msra.mxu0 %v1747
    %1768 = vmatprep.subr.bf16.mxu0 0
    %1769 = vmatpush1.bf16.msra.mxu0 %v1748
    %1770 = vmatprep.subr.bf16.mxu0 0
    %1771 = vmatpush1.bf16.msra.mxu0 %v1749
    %1772 = vmatprep.subr.bf16.mxu0 0
    %1773 = vmatpush1.bf16.msra.mxu0 %v1750
    %1774 = vmatprep.subr.bf16.mxu0 0
    %1775 = vmatpush1.bf16.msra.mxu0 %v1751
    %1776 = vmatprep.subr.bf16.mxu0 0
    %1777 = vmatpush1.bf16.msra.mxu0 0
    %1778 = vmatprep.subr.bf16.mxu0 0
    %1779 = vmatpush1.bf16.msra.mxu0 0
    %1780 = vmatprep.subr.bf16.mxu0 0
    %1781 = vmatpush1.bf16.msra.mxu0 0
    %1782 = vmatprep.subr.bf16.mxu0 0
    %1783 = vmatpush1.bf16.msra.mxu0 0
    %1784 = vmatprep.subr.bf16.mxu0 0
    %1785 = vmatpush1.bf16.msra.mxu0 0
    %1786 = vmatprep.subr.bf16.mxu0 0
    %1787 = vmatpush1.bf16.msra.mxu0 0
    %1788 = vmatprep.subr.bf16.mxu0 0
    %1789 = vmatpush1.bf16.msra.mxu0 0
    %1790 = vmatprep.subr.bf16.mxu0 0
    %1791 = vmatpush1.bf16.msra.mxu0 0
    %1792 = vmatprep.mubr.bf16.mxu0 0
    %1793 = vmatmul.mubr.bf16.gmra.mrb[0].mxu0 %v1526
    %v1794 = vpop.f32.mrb[0].mxu0
    %v1795 = vadd.f32 %v1650, %v1794
    %v1796 = vpop.f32.mrb[0].mxu0
    %v1797 = vpop.f32.mrb[0].mxu0
    %v1798 = vadd.f32 %v1653, %v1797
    %v1799 = vpop.f32.mrb[0].mxu0
    %1800 = vmatprep.mubr.bf16.mxu0 0
    %1801 = vmatmul.mubr.bf16.gmra.mrb[0].mxu0 %v1527
    %v1802 = vpop.f32.mrb[0].mxu0
    %v1803 = vadd.f32 %v1658, %v1802
    %v1804 = vpop.f32.mrb[0].mxu0
    %v1805 = vpop.f32.mrb[0].mxu0
    %v1806 = vadd.f32 %v1661, %v1805
    %v1807 = vpop.f32.mrb[0].mxu0
    %1808 = vmatprep.mubr.bf16.mxu0 0
    %1809 = vmatmul.mubr.bf16.gmra.mrb[0].mxu0 %v1528
    %v1810 = vpop.f32.mrb[0].mxu0
    %v1811 = vadd.f32 %v1666, %v1810
    %v1812 = vpop.f32.mrb[0].mxu0
    %v1813 = vpop.f32.mrb[0].mxu0
    %v1814 = vadd.f32 %v1669, %v1813
    %v1815 = vpop.f32.mrb[0].mxu0
    %1816 = vmatprep.mubr.bf16.mxu0 0
    %1817 = vmatmul.mubr.bf16.gmra.mrb[0].mxu0 %v1529
    %v1818 = vpop.f32.mrb[0].mxu0
    %v1819 = vadd.f32 %v1674, %v1818
    %v1820 = vpop.f32.mrb[0].mxu0
    %v1821 = vpop.f32.mrb[0].mxu0
    %v1822 = vadd.f32 %v1677, %v1821
    %v1823 = vpop.f32.mrb[0].mxu0
    %1824 = vmatprep.mubr.bf16.mxu0 0
    %1825 = vmatmul.mubr.bf16.gmra.mrb[0].mxu0 %v1530
    %v1826 = vpop.f32.mrb[0].mxu0
    %v1827 = vadd.f32 %v1682, %v1826
    %v1828 = vpop.f32.mrb[0].mxu0
    %v1829 = vpop.f32.mrb[0].mxu0
    %v1830 = vadd.f32 %v1685, %v1829
    %v1831 = vpop.f32.mrb[0].mxu0
    %1832 = vmatprep.mubr.bf16.mxu0 0
    %1833 = vmatmul.mubr.bf16.gmra.mrb[0].mxu0 %v1531
    %v1834 = vpop.f32.mrb[0].mxu0
    %v1835 = vadd.f32 %v1690, %v1834
    %v1836 = vpop.f32.mrb[0].mxu0
    %v1837 = vpop.f32.mrb[0].mxu0
    %v1838 = vadd.f32 %v1693, %v1837
    %v1839 = vpop.f32.mrb[0].mxu0
    %1840 = vmatprep.mubr.bf16.mxu0 0
    %1841 = vmatmul.mubr.bf16.gmra.mrb[0].mxu0 %v1532
    %v1842 = vpop.f32.mrb[0].mxu0
    %v1843 = vadd.f32 %v1698, %v1842
    %v1844 = vpop.f32.mrb[0].mxu0
    %v1845 = vpop.f32.mrb[0].mxu0
    %v1846 = vadd.f32 %v1701, %v1845
    %v1847 = vpop.f32.mrb[0].mxu0
    %1848 = vmatprep.mubr.bf16.mxu0 0
    %1849 = vmatmul.mubr.bf16.gmra.mrb[0].mxu0 %v1533
    %v1850 = vpop.f32.mrb[0].mxu0
    %v1851 = vadd.f32 %v1706, %v1850
    %v1852 = vpop.f32.mrb[0].mxu0
    %v1853 = vpop.f32.mrb[0].mxu0
    %v1854 = vadd.f32 %v1709, %v1853
    %v1855 = vpop.f32.mrb[0].mxu0
    %1856 = vdwg.mxu0
    %v1857 = vmax.f32 %v1795, 0.0
    %v1858 = vmax.f32 %v1798, 0.0
    %v1859 = vmax.f32 %v1803, 0.0
    %v1860 = vmax.f32 %v1806, 0.0
    %v1861 = vmax.f32 %v1811, 0.0
    %v1862 = vmax.f32 %v1814, 0.0
    %v1863 = vmax.f32 %v1819, 0.0
    %v1864 = vmax.f32 %v1822, 0.0
    %v1865 = vmax.f32 %v1827, 0.0
    %v1866 = vmax.f32 %v1830, 0.0
    %v1867 = vmax.f32 %v1835, 0.0
    %v1868 = vmax.f32 %v1838, 0.0
    %v1869 = vmax.f32 %v1843, 0.0
    %v1870 = vmax.f32 %v1846, 0.0
    %v1871 = vmax.f32 %v1851, 0.0
    %v1872 = vmax.f32 %v1854, 0.0
    %v1873 = vpack.c.bf16 %v1858, %v1857
    %v1874 = vpack.c.bf16 %v1860, %v1859
    %v1875 = vpack.c.bf16 %v1862, %v1861
    %v1876 = vpack.c.bf16 %v1864, %v1863
    %v1877 = vpack.c.bf16 %v1866, %v1865
    %v1878 = vpack.c.bf16 %v1868, %v1867
    %v1879 = vpack.c.bf16 %v1870, %v1869
    %v1880 = vpack.c.bf16 %v1872, %v1871
    %1881 = vmatprep.subr.bf16.mxu0 0
    %1882 = vmatpush1.bf16.msra.mxu0 %v1873
    %1883 = vmatprep.subr.bf16.mxu0 0
    %1884 = vmatpush1.bf16.msra.mxu0 %v1874
    %1885 = vmatprep.subr.bf16.mxu0 0
    %1886 = vmatpush1.bf16.msra.mxu0 %v1875
    %1887 = vmatprep.subr.bf16.mxu0 0
    %1888 = vmatpush1.bf16.msra.mxu0 %v1876
    %1889 = vmatprep.subr.bf16.mxu0 0
    %1890 = vmatpush1.bf16.msra.mxu0 %v1877
    %1891 = vmatprep.subr.bf16.mxu0 0
    %1892 = vmatpush1.bf16.msra.mxu0 %v1878
    %1893 = vmatprep.subr.bf16.mxu0 0
    %1894 = vmatpush1.bf16.msra.mxu0 %v1879
    %1895 = vmatprep.subr.bf16.mxu0 0
    %1896 = vmatpush1.bf16.msra.mxu0 %v1880
    %1897 = vmatprep.subr.bf16.mxu0 0
    %1898 = vmatpush1.bf16.msra.mxu0 0
    %1899 = vmatprep.subr.bf16.mxu0 0
    %1900 = vmatpush1.bf16.msra.mxu0 0
    %1901 = vmatprep.subr.bf16.mxu0 0
    %1902 = vmatpush1.bf16.msra.mxu0 0
    %1903 = vmatprep.subr.bf16.mxu0 0
    %1904 = vmatpush1.bf16.msra.mxu0 0
    %1905 = vmatprep.subr.bf16.mxu0 0
    %1906 = vmatpush1.bf16.msra.mxu0 0
    %1907 = vmatprep.subr.bf16.mxu0 0
    %1908 = vmatpush1.bf16.msra.mxu0 0
    %1909 = vmatprep.subr.bf16.mxu0 0
    %1910 = vmatpush1.bf16.msra.mxu0 0
    %1911 = vmatprep.subr.bf16.mxu0 0
    %1912 = vmatpush1.bf16.msra.mxu0 0
    %1913 = vmatprep.mubr.bf16.mxu0 0
    %1914 = vmatmul.mubr.bf16.gmra.mrb[0].mxu0 %v510
    %v1915 = vpop.f32.mrb[0].mxu0
    %v1916 = vadd.f32 0.0, %v1915
    %v1917 = vpop.f32.mrb[0].mxu0
    %v1918 = vpop.f32.mrb[0].mxu0
    %v1919 = vadd.f32 0.0, %v1918
    %v1920 = vpop.f32.mrb[0].mxu0
    %1921 = vmatprep.mubr.bf16.mxu0 0
    %1922 = vmatmul.mubr.bf16.gmra.mrb[0].mxu0 %v511
    %v1923 = vpop.f32.mrb[0].mxu0
    %v1924 = vadd.f32 0.0, %v1923
    %v1925 = vpop.f32.mrb[0].mxu0
    %v1926 = vpop.f32.mrb[0].mxu0
    %v1927 = vadd.f32 0.0, %v1926
    %v1928 = vpop.f32.mrb[0].mxu0
    %1929 = vmatprep.mubr.bf16.mxu0 0
    %1930 = vmatmul.mubr.bf16.gmra.mrb[0].mxu0 %v512
    %v1931 = vpop.f32.mrb[0].mxu0
    %v1932 = vadd.f32 0.0, %v1931
    %v1933 = vpop.f32.mrb[0].mxu0
    %v1934 = vpop.f32.mrb[0].mxu0
    %v1935 = vadd.f32 0.0, %v1934
    %v1936 = vpop.f32.mrb[0].mxu0
    %1937 = vmatprep.mubr.bf16.mxu0 0
    %1938 = vmatmul.mubr.bf16.gmra.mrb[0].mxu0 %v513
    %v1939 = vpop.f32.mrb[0].mxu0
    %v1940 = vadd.f32 0.0, %v1939
    %v1941 = vpop.f32.mrb[0].mxu0
    %v1942 = vpop.f32.mrb[0].mxu0
    %v1943 = vadd.f32 0.0, %v1942
    %v1944 = vpop.f32.mrb[0].mxu0
    %1945 = vmatprep.mubr.bf16.mxu0 0
    %1946 = vmatmul.mubr.bf16.gmra.mrb[0].mxu0 %v514
    %v1947 = vpop.f32.mrb[0].mxu0
    %v1948 = vadd.f32 0.0, %v1947
    %v1949 = vpop.f32.mrb[0].mxu0
    %v1950 = vpop.f32.mrb[0].mxu0
    %v1951 = vadd.f32 0.0, %v1950
    %v1952 = vpop.f32.mrb[0].mxu0
    %1953 = vmatprep.mubr.bf16.mxu0 0
    %1954 = vmatmul.mubr.bf16.gmra.mrb[0].mxu0 %v515
    %v1955 = vpop.f32.mrb[0].mxu0
    %v1956 = vadd.f32 0.0, %v1955
    %v1957 = vpop.f32.mrb[0].mxu0
    %v1958 = vpop.f32.mrb[0].mxu0
    %v1959 = vadd.f32 0.0, %v1958
    %v1960 = vpop.f32.mrb[0].mxu0
    %1961 = vmatprep.mubr.bf16.mxu0 0
    %1962 = vmatmul.mubr.bf16.gmra.mrb[0].mxu0 %v516
    %v1963 = vpop.f32.mrb[0].mxu0
    %v1964 = vadd.f32 0.0, %v1963
    %v1965 = vpop.f32.mrb[0].mxu0
    %v1966 = vpop.f32.mrb[0].mxu0
    %v1967 = vadd.f32 0.0, %v1966
    %v1968 = vpop.f32.mrb[0].mxu0
    %1969 = vmatprep.mubr.bf16.mxu0 0
    %1970 = vmatmul.mubr.bf16.gmra.mrb[0].mxu0 %v517
    %v1971 = vpop.f32.mrb[0].mxu0
    %v1972 = vadd.f32 0.0, %v1971
    %v1973 = vpop.f32.mrb[0].mxu0
    %v1974 = vpop.f32.mrb[0].mxu0
    %v1975 = vadd.f32 0.0, %v1974
    %v1976 = vpop.f32.mrb[0].mxu0
    %1977 = vdwg.mxu0
    %v1978 = vpack.c.bf16 %v1919, %v1916
    %v1979 = vpack.c.bf16 %v1927, %v1924
    %v1980 = vpack.c.bf16 %v1935, %v1932
    %v1981 = vpack.c.bf16 %v1943, %v1940
    %v1982 = vpack.c.bf16 %v1951, %v1948
    %v1983 = vpack.c.bf16 %v1959, %v1956
    %v1984 = vpack.c.bf16 %v1967, %v1964
    %v1985 = vpack.c.bf16 %v1975, %v1972
    %s1986 = scalar_lea.vmem [#allocation8], 384
    %v1987 = vld [vmem:[%s1986] sm:$0xf]
    %v1988 = vld [vmem:[%s1986 + $0x4] sm:$0xf]
    %v1989 = vld [vmem:[%s1986 + $0x8] sm:$0xf]
    %v1990 = vld [vmem:[%s1986 + $0xc] sm:$0xf]
    %v1991 = vld [vmem:[%s1986 + $0x10] sm:$0xf]
    %v1992 = vld [vmem:[%s1986 + $0x14] sm:$0xf]
    %v1993 = vld [vmem:[%s1986 + $0x18] sm:$0xf]
    %v1994 = vld [vmem:[%s1986 + $0x1c] sm:$0xf]
    %v1995 = vld [vmem:[%s1986 + $0x20] sm:$0xf]
    %v1996 = vld [vmem:[%s1986 + $0x24] sm:$0xf]
    %v1997 = vld [vmem:[%s1986 + $0x28] sm:$0xf]
    %v1998 = vld [vmem:[%s1986 + $0x2c] sm:$0xf]
    %v1999 = vld [vmem:[%s1986 + $0x30] sm:$0xf]
    %v2000 = vld [vmem:[%s1986 + $0x34] sm:$0xf]
    %v2001 = vld [vmem:[%s1986 + $0x38] sm:$0xf]
    %v2002 = vld [vmem:[%s1986 + $0x3c] sm:$0xf]
    %v2003 = vld [vmem:[%s1986 + $0x40] sm:$0xf]
    %v2004 = vld [vmem:[%s1986 + $0x44] sm:$0xf]
    %v2005 = vld [vmem:[%s1986 + $0x48] sm:$0xf]
    %v2006 = vld [vmem:[%s1986 + $0x4c] sm:$0xf]
    %v2007 = vld [vmem:[%s1986 + $0x50] sm:$0xf]
    %v2008 = vld [vmem:[%s1986 + $0x54] sm:$0xf]
    %v2009 = vld [vmem:[%s1986 + $0x58] sm:$0xf]
    %v2010 = vld [vmem:[%s1986 + $0x5c] sm:$0xf]
    %v2011 = vld [vmem:[%s1986 + $0x60] sm:$0xf]
    %v2012 = vld [vmem:[%s1986 + $0x64] sm:$0xf]
    %v2013 = vld [vmem:[%s1986 + $0x68] sm:$0xf]
    %v2014 = vld [vmem:[%s1986 + $0x6c] sm:$0xf]
    %v2015 = vld [vmem:[%s1986 + $0x70] sm:$0xf]
    %v2016 = vld [vmem:[%s1986 + $0x74] sm:$0xf]
    %v2017 = vld [vmem:[%s1986 + $0x78] sm:$0xf]
    %v2018 = vld [vmem:[%s1986 + $0x7c] sm:$0xf]
    %v2035 = vunpack.c.l.b16 %v2003
    %v2036 = vunpack.c.l.b16 %v2004
    %v2037 = vunpack.c.l.b16 %v2005
    %v2038 = vunpack.c.l.b16 %v2006
    %v2039 = vunpack.c.l.b16 %v2007
    %v2040 = vunpack.c.l.b16 %v2008
    %v2041 = vunpack.c.l.b16 %v2009
    %v2042 = vunpack.c.l.b16 %v2010
    %v2043 = vunpack.c.l.b16 %v2011
    %v2044 = vunpack.c.l.b16 %v2012
    %v2045 = vunpack.c.l.b16 %v2013
    %v2046 = vunpack.c.l.b16 %v2014
    %v2047 = vunpack.c.l.b16 %v2015
    %v2048 = vunpack.c.l.b16 %v2016
    %v2049 = vunpack.c.l.b16 %v2017
    %v2050 = vunpack.c.l.b16 %v2018
    %v2051 = vpack.c.b16 %v2036, %v2035
    %v2052 = vpack.c.b16 %v2038, %v2037
    %v2053 = vpack.c.b16 %v2040, %v2039
    %v2054 = vpack.c.b16 %v2042, %v2041
    %v2055 = vpack.c.b16 %v2044, %v2043
    %v2056 = vpack.c.b16 %v2046, %v2045
    %v2057 = vpack.c.b16 %v2048, %v2047
    %v2058 = vpack.c.b16 %v2050, %v2049
    %2067 = vmatprep.subr.bf16.mxu0 0
    %2068 = vmatpush1.bf16.msra.mxu0 %v2051
    %2069 = vmatprep.subr.bf16.mxu0 0
    %2070 = vmatpush1.bf16.msra.mxu0 %v2052
    %2071 = vmatprep.subr.bf16.mxu0 0
    %2072 = vmatpush1.bf16.msra.mxu0 %v2053
    %2073 = vmatprep.subr.bf16.mxu0 0
    %2074 = vmatpush1.bf16.msra.mxu0 %v2054
    %2075 = vmatprep.subr.bf16.mxu0 0
    %2076 = vmatpush1.bf16.msra.mxu0 %v2055
    %2077 = vmatprep.subr.bf16.mxu0 0
    %2078 = vmatpush1.bf16.msra.mxu0 %v2056
    %2079 = vmatprep.subr.bf16.mxu0 0
    %2080 = vmatpush1.bf16.msra.mxu0 %v2057
    %2081 = vmatprep.subr.bf16.mxu0 0
    %2082 = vmatpush1.bf16.msra.mxu0 %v2058
    %2083 = vmatprep.subr.bf16.mxu0 0
    %2084 = vmatpush1.bf16.msra.mxu0 0
    %2085 = vmatprep.subr.bf16.mxu0 0
    %2086 = vmatpush1.bf16.msra.mxu0 0
    %2087 = vmatprep.subr.bf16.mxu0 0
    %2088 = vmatpush1.bf16.msra.mxu0 0
    %2089 = vmatprep.subr.bf16.mxu0 0
    %2090 = vmatpush1.bf16.msra.mxu0 0
    %2091 = vmatprep.subr.bf16.mxu0 0
    %2092 = vmatpush1.bf16.msra.mxu0 0
    %2093 = vmatprep.subr.bf16.mxu0 0
    %2094 = vmatpush1.bf16.msra.mxu0 0
    %2095 = vmatprep.subr.bf16.mxu0 0
    %2096 = vmatpush1.bf16.msra.mxu0 0
    %2097 = vmatprep.subr.bf16.mxu0 0
    %2098 = vmatpush1.bf16.msra.mxu0 0
    %2099 = vmatprep.mubr.bf16.mxu0 0
    %2100 = vmatmul.mubr.bf16.gmra.mrb[0].mxu0 %v454
    %v2101 = vpop.f32.mrb[0].mxu0
    %v2102 = vadd.f32 0.0, %v2101
    %v2103 = vpop.f32.mrb[0].mxu0
    %v2104 = vpop.f32.mrb[0].mxu0
    %v2105 = vadd.f32 0.0, %v2104
    %v2106 = vpop.f32.mrb[0].mxu0
    %2107 = vmatprep.mubr.bf16.mxu0 0
    %2108 = vmatmul.mubr.bf16.gmra.mrb[0].mxu0 %v455
    %v2109 = vpop.f32.mrb[0].mxu0
    %v2110 = vadd.f32 0.0, %v2109
    %v2111 = vpop.f32.mrb[0].mxu0
    %v2112 = vpop.f32.mrb[0].mxu0
    %v2113 = vadd.f32 0.0, %v2112
    %v2114 = vpop.f32.mrb[0].mxu0
    %2115 = vmatprep.mubr.bf16.mxu0 0
    %2116 = vmatmul.mubr.bf16.gmra.mrb[0].mxu0 %v456
    %v2117 = vpop.f32.mrb[0].mxu0
    %v2118 = vadd.f32 0.0, %v2117
    %v2119 = vpop.f32.mrb[0].mxu0
    %v2120 = vpop.f32.mrb[0].mxu0
    %v2121 = vadd.f32 0.0, %v2120
    %v2122 = vpop.f32.mrb[0].mxu0
    %2123 = vmatprep.mubr.bf16.mxu0 0
    %2124 = vmatmul.mubr.bf16.gmra.mrb[0].mxu0 %v457
    %v2125 = vpop.f32.mrb[0].mxu0
    %v2126 = vadd.f32 0.0, %v2125
    %v2127 = vpop.f32.mrb[0].mxu0
    %v2128 = vpop.f32.mrb[0].mxu0
    %v2129 = vadd.f32 0.0, %v2128
    %v2130 = vpop.f32.mrb[0].mxu0
    %2131 = vmatprep.mubr.bf16.mxu0 0
    %2132 = vmatmul.mubr.bf16.gmra.mrb[0].mxu0 %v458
    %v2133 = vpop.f32.mrb[0].mxu0
    %v2134 = vadd.f32 0.0, %v2133
    %v2135 = vpop.f32.mrb[0].mxu0
    %v2136 = vpop.f32.mrb[0].mxu0
    %v2137 = vadd.f32 0.0, %v2136
    %v2138 = vpop.f32.mrb[0].mxu0
    %2139 = vmatprep.mubr.bf16.mxu0 0
    %2140 = vmatmul.mubr.bf16.gmra.mrb[0].mxu0 %v459
    %v2141 = vpop.f32.mrb[0].mxu0
    %v2142 = vadd.f32 0.0, %v2141
    %v2143 = vpop.f32.mrb[0].mxu0
    %v2144 = vpop.f32.mrb[0].mxu0
    %v2145 = vadd.f32 0.0, %v2144
    %v2146 = vpop.f32.mrb[0].mxu0
    %2147 = vmatprep.mubr.bf16.mxu0 0
    %2148 = vmatmul.mubr.bf16.gmra.mrb[0].mxu0 %v460
    %v2149 = vpop.f32.mrb[0].mxu0
    %v2150 = vadd.f32 0.0, %v2149
    %v2151 = vpop.f32.mrb[0].mxu0
    %v2152 = vpop.f32.mrb[0].mxu0
    %v2153 = vadd.f32 0.0, %v2152
    %v2154 = vpop.f32.mrb[0].mxu0
    %2155 = vmatprep.mubr.bf16.mxu0 0
    %2156 = vmatmul.mubr.bf16.gmra.mrb[0].mxu0 %v461
    %v2157 = vpop.f32.mrb[0].mxu0
    %v2158 = vadd.f32 0.0, %v2157
    %v2159 = vpop.f32.mrb[0].mxu0
    %v2160 = vpop.f32.mrb[0].mxu0
    %v2161 = vadd.f32 0.0, %v2160
    %v2162 = vpop.f32.mrb[0].mxu0
    %2163 = vdwg.mxu0
    %v2180 = vunpack.c.l.b16 %v1987
    %v2181 = vunpack.c.l.b16 %v1988
    %v2182 = vunpack.c.l.b16 %v1989
    %v2183 = vunpack.c.l.b16 %v1990
    %v2184 = vunpack.c.l.b16 %v1991
    %v2185 = vunpack.c.l.b16 %v1992
    %v2186 = vunpack.c.l.b16 %v1993
    %v2187 = vunpack.c.l.b16 %v1994
    %v2188 = vunpack.c.l.b16 %v1995
    %v2189 = vunpack.c.l.b16 %v1996
    %v2190 = vunpack.c.l.b16 %v1997
    %v2191 = vunpack.c.l.b16 %v1998
    %v2192 = vunpack.c.l.b16 %v1999
    %v2193 = vunpack.c.l.b16 %v2000
    %v2194 = vunpack.c.l.b16 %v2001
    %v2195 = vunpack.c.l.b16 %v2002
    %v2196 = vpack.c.b16 %v2181, %v2180
    %v2197 = vpack.c.b16 %v2183, %v2182
    %v2198 = vpack.c.b16 %v2185, %v2184
    %v2199 = vpack.c.b16 %v2187, %v2186
    %v2200 = vpack.c.b16 %v2189, %v2188
    %v2201 = vpack.c.b16 %v2191, %v2190
    %v2202 = vpack.c.b16 %v2193, %v2192
    %v2203 = vpack.c.b16 %v2195, %v2194
    %2212 = vmatprep.subr.bf16.mxu0 0
    %2213 = vmatpush1.bf16.msra.mxu0 %v2196
    %2214 = vmatprep.subr.bf16.mxu0 0
    %2215 = vmatpush1.bf16.msra.mxu0 %v2197
    %2216 = vmatprep.subr.bf16.mxu0 0
    %2217 = vmatpush1.bf16.msra.mxu0 %v2198
    %2218 = vmatprep.subr.bf16.mxu0 0
    %2219 = vmatpush1.bf16.msra.mxu0 %v2199
    %2220 = vmatprep.subr.bf16.mxu0 0
    %2221 = vmatpush1.bf16.msra.mxu0 %v2200
    %2222 = vmatprep.subr.bf16.mxu0 0
    %2223 = vmatpush1.bf16.msra.mxu0 %v2201
    %2224 = vmatprep.subr.bf16.mxu0 0
    %2225 = vmatpush1.bf16.msra.mxu0 %v2202
    %2226 = vmatprep.subr.bf16.mxu0 0
    %2227 = vmatpush1.bf16.msra.mxu0 %v2203
    %2228 = vmatprep.subr.bf16.mxu0 0
    %2229 = vmatpush1.bf16.msra.mxu0 0
    %2230 = vmatprep.subr.bf16.mxu0 0
    %2231 = vmatpush1.bf16.msra.mxu0 0
    %2232 = vmatprep.subr.bf16.mxu0 0
    %2233 = vmatpush1.bf16.msra.mxu0 0
    %2234 = vmatprep.subr.bf16.mxu0 0
    %2235 = vmatpush1.bf16.msra.mxu0 0
    %2236 = vmatprep.subr.bf16.mxu0 0
    %2237 = vmatpush1.bf16.msra.mxu0 0
    %2238 = vmatprep.subr.bf16.mxu0 0
    %2239 = vmatpush1.bf16.msra.mxu0 0
    %2240 = vmatprep.subr.bf16.mxu0 0
    %2241 = vmatpush1.bf16.msra.mxu0 0
    %2242 = vmatprep.subr.bf16.mxu0 0
    %2243 = vmatpush1.bf16.msra.mxu0 0
    %2244 = vmatprep.mubr.bf16.mxu0 0
    %2245 = vmatmul.mubr.bf16.gmra.mrb[0].mxu0 %v1978
    %v2246 = vpop.f32.mrb[0].mxu0
    %v2247 = vadd.f32 %v2102, %v2246
    %v2248 = vpop.f32.mrb[0].mxu0
    %v2249 = vpop.f32.mrb[0].mxu0
    %v2250 = vadd.f32 %v2105, %v2249
    %v2251 = vpop.f32.mrb[0].mxu0
    %2252 = vmatprep.mubr.bf16.mxu0 0
    %2253 = vmatmul.mubr.bf16.gmra.mrb[0].mxu0 %v1979
    %v2254 = vpop.f32.mrb[0].mxu0
    %v2255 = vadd.f32 %v2110, %v2254
    %v2256 = vpop.f32.mrb[0].mxu0
    %v2257 = vpop.f32.mrb[0].mxu0
    %v2258 = vadd.f32 %v2113, %v2257
    %v2259 = vpop.f32.mrb[0].mxu0
    %2260 = vmatprep.mubr.bf16.mxu0 0
    %2261 = vmatmul.mubr.bf16.gmra.mrb[0].mxu0 %v1980
    %v2262 = vpop.f32.mrb[0].mxu0
    %v2263 = vadd.f32 %v2118, %v2262
    %v2264 = vpop.f32.mrb[0].mxu0
    %v2265 = vpop.f32.mrb[0].mxu0
    %v2266 = vadd.f32 %v2121, %v2265
    %v2267 = vpop.f32.mrb[0].mxu0
    %2268 = vmatprep.mubr.bf16.mxu0 0
    %2269 = vmatmul.mubr.bf16.gmra.mrb[0].mxu0 %v1981
    %v2270 = vpop.f32.mrb[0].mxu0
    %v2271 = vadd.f32 %v2126, %v2270
    %v2272 = vpop.f32.mrb[0].mxu0
    %v2273 = vpop.f32.mrb[0].mxu0
    %v2274 = vadd.f32 %v2129, %v2273
    %v2275 = vpop.f32.mrb[0].mxu0
    %2276 = vmatprep.mubr.bf16.mxu0 0
    %2277 = vmatmul.mubr.bf16.gmra.mrb[0].mxu0 %v1982
    %v2278 = vpop.f32.mrb[0].mxu0
    %v2279 = vadd.f32 %v2134, %v2278
    %v2280 = vpop.f32.mrb[0].mxu0
    %v2281 = vpop.f32.mrb[0].mxu0
    %v2282 = vadd.f32 %v2137, %v2281
    %v2283 = vpop.f32.mrb[0].mxu0
    %2284 = vmatprep.mubr.bf16.mxu0 0
    %2285 = vmatmul.mubr.bf16.gmra.mrb[0].mxu0 %v1983
    %v2286 = vpop.f32.mrb[0].mxu0
    %v2287 = vadd.f32 %v2142, %v2286
    %v2288 = vpop.f32.mrb[0].mxu0
    %v2289 = vpop.f32.mrb[0].mxu0
    %v2290 = vadd.f32 %v2145, %v2289
    %v2291 = vpop.f32.mrb[0].mxu0
    %2292 = vmatprep.mubr.bf16.mxu0 0
    %2293 = vmatmul.mubr.bf16.gmra.mrb[0].mxu0 %v1984
    %v2294 = vpop.f32.mrb[0].mxu0
    %v2295 = vadd.f32 %v2150, %v2294
    %v2296 = vpop.f32.mrb[0].mxu0
    %v2297 = vpop.f32.mrb[0].mxu0
    %v2298 = vadd.f32 %v2153, %v2297
    %v2299 = vpop.f32.mrb[0].mxu0
    %2300 = vmatprep.mubr.bf16.mxu0 0
    %2301 = vmatmul.mubr.bf16.gmra.mrb[0].mxu0 %v1985
    %v2302 = vpop.f32.mrb[0].mxu0
    %v2303 = vadd.f32 %v2158, %v2302
    %v2304 = vpop.f32.mrb[0].mxu0
    %v2305 = vpop.f32.mrb[0].mxu0
    %v2306 = vadd.f32 %v2161, %v2305
    %v2307 = vpop.f32.mrb[0].mxu0
    %2308 = vdwg.mxu0
    %v2309 = vmax.f32 %v2247, 0.0
    %v2310 = vmax.f32 %v2250, 0.0
    %v2311 = vmax.f32 %v2255, 0.0
    %v2312 = vmax.f32 %v2258, 0.0
    %v2313 = vmax.f32 %v2263, 0.0
    %v2314 = vmax.f32 %v2266, 0.0
    %v2315 = vmax.f32 %v2271, 0.0
    %v2316 = vmax.f32 %v2274, 0.0
    %v2317 = vmax.f32 %v2279, 0.0
    %v2318 = vmax.f32 %v2282, 0.0
    %v2319 = vmax.f32 %v2287, 0.0
    %v2320 = vmax.f32 %v2290, 0.0
    %v2321 = vmax.f32 %v2295, 0.0
    %v2322 = vmax.f32 %v2298, 0.0
    %v2323 = vmax.f32 %v2303, 0.0
    %v2324 = vmax.f32 %v2306, 0.0
    %v2325 = vpack.c.bf16 %v2310, %v2309
    %v2326 = vpack.c.bf16 %v2312, %v2311
    %v2327 = vpack.c.bf16 %v2314, %v2313
    %v2328 = vpack.c.bf16 %v2316, %v2315
    %v2329 = vpack.c.bf16 %v2318, %v2317
    %v2330 = vpack.c.bf16 %v2320, %v2319
    %v2331 = vpack.c.bf16 %v2322, %v2321
    %v2332 = vpack.c.bf16 %v2324, %v2323
    %v2333 = vld [vmem:[#allocation10] sm:$0xf]
    %v2334 = vld [vmem:[#allocation10 + $0x4] sm:$0xf]
    %v2335 = vld [vmem:[#allocation10 + $0x8] sm:$0xf]
    %v2336 = vld [vmem:[#allocation10 + $0xc] sm:$0xf]
    %v2337 = vld [vmem:[#allocation10 + $0x10] sm:$0xf]
    %v2338 = vld [vmem:[#allocation10 + $0x14] sm:$0xf]
    %v2339 = vld [vmem:[#allocation10 + $0x18] sm:$0xf]
    %v2340 = vld [vmem:[#allocation10 + $0x1c] sm:$0xf]
    %v2341 = vld [vmem:[#allocation10 + $0x20] sm:$0xf]
    %v2342 = vld [vmem:[#allocation10 + $0x24] sm:$0xf]
    %v2343 = vld [vmem:[#allocation10 + $0x28] sm:$0xf]
    %v2344 = vld [vmem:[#allocation10 + $0x2c] sm:$0xf]
    %v2345 = vld [vmem:[#allocation10 + $0x30] sm:$0xf]
    %v2346 = vld [vmem:[#allocation10 + $0x34] sm:$0xf]
    %v2347 = vld [vmem:[#allocation10 + $0x38] sm:$0xf]
    %v2348 = vld [vmem:[#allocation10 + $0x3c] sm:$0xf]
    %v2349 = vld [vmem:[%s5] sm:$0x1]
    %v2351 = vlaneseq
    %v2352 = vshrl.u32 %v2351, 7
    %v2353 = vsub.s32 0, %v2352
    %v2354 = vrot.slane %v2349, %v2353
    %v2372 = vunpack.c.l.b16 %v2333
    %v2373 = vunpack.c.l.b16 %v2334
    %v2374 = vunpack.c.l.b16 %v2335
    %v2375 = vunpack.c.l.b16 %v2336
    %v2376 = vunpack.c.l.b16 %v2337
    %v2377 = vunpack.c.l.b16 %v2338
    %v2378 = vunpack.c.l.b16 %v2339
    %v2379 = vunpack.c.l.b16 %v2340
    %v2380 = vunpack.c.l.b16 %v2341
    %v2381 = vunpack.c.l.b16 %v2342
    %v2382 = vunpack.c.l.b16 %v2343
    %v2383 = vunpack.c.l.b16 %v2344
    %v2384 = vunpack.c.l.b16 %v2345
    %v2385 = vunpack.c.l.b16 %v2346
    %v2386 = vunpack.c.l.b16 %v2347
    %v2387 = vunpack.c.l.b16 %v2348
    %v2388 = vpack.c.b16 %v2373, %v2372
    %v2389 = vpack.c.b16 %v2375, %v2374
    %v2390 = vpack.c.b16 %v2377, %v2376
    %v2391 = vpack.c.b16 %v2379, %v2378
    %v2392 = vpack.c.b16 %v2381, %v2380
    %v2393 = vpack.c.b16 %v2383, %v2382
    %v2394 = vpack.c.b16 %v2385, %v2384
    %v2395 = vpack.c.b16 %v2387, %v2386
    %2404 = vmatprep.subr.bf16.mxu0 0
    %2405 = vmatpush1.bf16.msra.mxu0 %v2388
    %2406 = vmatprep.subr.bf16.mxu0 0
    %2407 = vmatpush1.bf16.msra.mxu0 %v2389
    %2408 = vmatprep.subr.bf16.mxu0 0
    %2409 = vmatpush1.bf16.msra.mxu0 %v2390
    %2410 = vmatprep.subr.bf16.mxu0 0
    %2411 = vmatpush1.bf16.msra.mxu0 %v2391
    %2412 = vmatprep.subr.bf16.mxu0 0
    %2413 = vmatpush1.bf16.msra.mxu0 %v2392
    %2414 = vmatprep.subr.bf16.mxu0 0
    %2415 = vmatpush1.bf16.msra.mxu0 %v2393
    %2416 = vmatprep.subr.bf16.mxu0 0
    %2417 = vmatpush1.bf16.msra.mxu0 %v2394
    %2418 = vmatprep.subr.bf16.mxu0 0
    %2419 = vmatpush1.bf16.msra.mxu0 %v2395
    %2420 = vmatprep.subr.bf16.mxu0 0
    %2421 = vmatpush1.bf16.msra.mxu0 0
    %2422 = vmatprep.subr.bf16.mxu0 0
    %2423 = vmatpush1.bf16.msra.mxu0 0
    %2424 = vmatprep.subr.bf16.mxu0 0
    %2425 = vmatpush1.bf16.msra.mxu0 0
    %2426 = vmatprep.subr.bf16.mxu0 0
    %2427 = vmatpush1.bf16.msra.mxu0 0
    %2428 = vmatprep.subr.bf16.mxu0 0
    %2429 = vmatpush1.bf16.msra.mxu0 0
    %2430 = vmatprep.subr.bf16.mxu0 0
    %2431 = vmatpush1.bf16.msra.mxu0 0
    %2432 = vmatprep.subr.bf16.mxu0 0
    %2433 = vmatpush1.bf16.msra.mxu0 0
    %2434 = vmatprep.subr.bf16.mxu0 0
    %2435 = vmatpush1.bf16.msra.mxu0 0
    %2436 = vmatprep.mubr.bf16.mxu0 0
    %2437 = vmatmul.mubr.bf16.gmra.mrb[0].mxu0 %v2325
    %v2438 = vpop.f32.mrb[0].mxu0
    %v2439 = vadd.f32 %v2354, %v2438
    %v2440 = vpop.f32.mrb[0].mxu0
    %v2441 = vpop.f32.mrb[0].mxu0
    %v2442 = vadd.f32 %v2354, %v2441
    %v2443 = vpop.f32.mrb[0].mxu0
    %2444 = vmatprep.mubr.bf16.mxu0 0
    %2445 = vmatmul.mubr.bf16.gmra.mrb[0].mxu0 %v2326
    %v2446 = vpop.f32.mrb[0].mxu0
    %v2447 = vadd.f32 %v2354, %v2446
    %v2448 = vpop.f32.mrb[0].mxu0
    %v2449 = vpop.f32.mrb[0].mxu0
    %v2450 = vadd.f32 %v2354, %v2449
    %v2451 = vpop.f32.mrb[0].mxu0
    %2452 = vmatprep.mubr.bf16.mxu0 0
    %2453 = vmatmul.mubr.bf16.gmra.mrb[0].mxu0 %v2327
    %v2454 = vpop.f32.mrb[0].mxu0
    %v2455 = vadd.f32 %v2354, %v2454
    %v2456 = vpop.f32.mrb[0].mxu0
    %v2457 = vpop.f32.mrb[0].mxu0
    %v2458 = vadd.f32 %v2354, %v2457
    %v2459 = vpop.f32.mrb[0].mxu0
    %2460 = vmatprep.mubr.bf16.mxu0 0
    %2461 = vmatmul.mubr.bf16.gmra.mrb[0].mxu0 %v2328
    %v2462 = vpop.f32.mrb[0].mxu0
    %v2463 = vadd.f32 %v2354, %v2462
    %v2464 = vpop.f32.mrb[0].mxu0
    %v2465 = vpop.f32.mrb[0].mxu0
    %v2466 = vadd.f32 %v2354, %v2465
    %v2467 = vpop.f32.mrb[0].mxu0
    %2468 = vmatprep.mubr.bf16.mxu0 0
    %2469 = vmatmul.mubr.bf16.gmra.mrb[0].mxu0 %v2329
    %v2470 = vpop.f32.mrb[0].mxu0
    %v2471 = vadd.f32 %v2354, %v2470
    %v2472 = vpop.f32.mrb[0].mxu0
    %v2473 = vpop.f32.mrb[0].mxu0
    %v2474 = vadd.f32 %v2354, %v2473
    %v2475 = vpop.f32.mrb[0].mxu0
    %2476 = vmatprep.mubr.bf16.mxu0 0
    %2477 = vmatmul.mubr.bf16.gmra.mrb[0].mxu0 %v2330
    %v2478 = vpop.f32.mrb[0].mxu0
    %v2479 = vadd.f32 %v2354, %v2478
    %v2480 = vpop.f32.mrb[0].mxu0
    %v2481 = vpop.f32.mrb[0].mxu0
    %v2482 = vadd.f32 %v2354, %v2481
    %v2483 = vpop.f32.mrb[0].mxu0
    %2484 = vmatprep.mubr.bf16.mxu0 0
    %2485 = vmatmul.mubr.bf16.gmra.mrb[0].mxu0 %v2331
    %v2486 = vpop.f32.mrb[0].mxu0
    %v2487 = vadd.f32 %v2354, %v2486
    %v2488 = vpop.f32.mrb[0].mxu0
    %v2489 = vpop.f32.mrb[0].mxu0
    %v2490 = vadd.f32 %v2354, %v2489
    %v2491 = vpop.f32.mrb[0].mxu0
    %2492 = vmatprep.mubr.bf16.mxu0 0
    %2493 = vmatmul.mubr.bf16.gmra.mrb[0].mxu0 %v2332
    %v2494 = vpop.f32.mrb[0].mxu0
    %v2495 = vadd.f32 %v2354, %v2494
    %v2496 = vpop.f32.mrb[0].mxu0
    %v2497 = vpop.f32.mrb[0].mxu0
    %v2498 = vadd.f32 %v2354, %v2497
    %v2499 = vpop.f32.mrb[0].mxu0
    %2500 = vdwg.mxu0
    %2501 = vst [vmem:[#allocation11] sm:$0xff] %v2439
    %2502 = vst [vmem:[#allocation11 + $0x8] sm:$0xff] %v2442
    %2503 = vst [vmem:[#allocation11 + $0x10] sm:$0xff] %v2447
    %2504 = vst [vmem:[#allocation11 + $0x18] sm:$0xff] %v2450
    %2505 = vst [vmem:[#allocation11 + $0x20] sm:$0xff] %v2455
    %2506 = vst [vmem:[#allocation11 + $0x28] sm:$0xff] %v2458
    %2507 = vst [vmem:[#allocation11 + $0x30] sm:$0xff] %v2463
    %2508 = vst [vmem:[#allocation11 + $0x38] sm:$0xff] %v2466
    %2509 = vst [vmem:[#allocation11 + $0x40] sm:$0xff] %v2471
    %2510 = vst [vmem:[#allocation11 + $0x48] sm:$0xff] %v2474
    %2511 = vst [vmem:[#allocation11 + $0x50] sm:$0xff] %v2479
    %2512 = vst [vmem:[#allocation11 + $0x58] sm:$0xff] %v2482
    %2513 = vst [vmem:[#allocation11 + $0x60] sm:$0xff] %v2487
    %2514 = vst [vmem:[#allocation11 + $0x68] sm:$0xff] %v2490
    %2515 = vst [vmem:[#allocation11 + $0x70] sm:$0xff] %v2495
    %2516 = vst [vmem:[#allocation11 + $0x78] sm:$0xff] %v2498
    // Predicated region
    $region46: #{tpu_custom_call.1} parent=1 // pred_check
      _
    $region47: #{tpu_custom_call.1} parent=1 // pred_check_branch
      %2518 = sbr.rel (0) target = $region49
    $region48: #{tpu_custom_call.1} parent=1 // pred_region
      %s2520 = ssub.s32 2048, 2048
      %2521 = vsyncadd [#allocation4], %s2520
      %s2522 = sshll.u32 [#allocation11], 4
      %s2523 = int_to_ptr.vmem [resolvable:$true] %s2522
      %2528 = dma.vmem_to_hbm [thread:$0]  %s2523, 2048, %s6, [#allocation4], 128, 128, 8
    $region49: #{tpu_custom_call.1} parent=1 // pred_fallthru
      _
    // Predicated region
    $region50: #{tpu_custom_call.1} parent=1 // pred_check
      _
    $region51: #{tpu_custom_call.1} parent=1 // pred_check_branch
      %2530 = sbr.rel (0) target = $region53
    $region52: #{tpu_custom_call.1} parent=1 // pred_region
      %2531 = dma.done [#allocation4], 2048
    $region53: #{tpu_custom_call.1} parent=1 // pred_fallthru
      _
    %2532 = vsyncpa [#allocation3], 1
    %2533 = vsyncpa [#allocation6], 1
    %2534 = vsyncpa [#allocation9], 1
    %2535 = vsyncpa [#allocation4], 1

</llo_original>
